<compile_context>
chip_gen: v5e
topology: v5e:2x2
jax: 0.10.0
libtpu: 0.0.40
codegen_flags: <defaults>
</compile_context>

<pallas_src>
import jax
import jax.numpy as jnp
from jax.experimental import pallas as pl
from jax.experimental.pallas import tpu as pltpu

EPS = 1e-5                     # torch.nn.BatchNorm2d default eps
MAX_TILE_PIXELS = 32768        # ~12 MB/step incl. double buffers -> safe on v5e/v6e/v7x
VMEM_LIMIT = 32 * 1024 * 1024


def _plan_tiles(p, max_tile=MAX_TILE_PIXELS):
    """Balanced pixel tiling: TP multiple of 128, Pp = n_tiles*TP >= p (pad <~ 128/tile)."""
    p128 = ((p + 127) // 128) * 128
    n_tiles = max(1, -(-p128 // max_tile))            # cdiv
    tp = ((-(-p128 // n_tiles) + 127) // 128) * 128   # round_up(cdiv, 128)
    pp = n_tiles * tp
    return tp, n_tiles, pp


# --------------------------------------------------------------------------
# pass 1: per-batch BatchNorm partial statistics (bias-shifted sums of v4/v11)
# --------------------------------------------------------------------------
def _stats_kernel(x1_ref, x2_ref, x3_ref, w1_ref, w2_ref, w3_ref,
                  s4_ref, s11_ref, q4_ref, q11_ref):
    @pl.when(pl.program_id(1) == 0)
    def _():
        s4_ref[...] = jnp.zeros_like(s4_ref)
        s11_ref[...] = jnp.zeros_like(s11_ref)
        q4_ref[...] = jnp.zeros_like(q4_ref)
        q11_ref[...] = jnp.zeros_like(q11_ref)

    # shared middle conv (review item 1): only 3 small dots, 24 useful rows.
    t2 = jnp.dot(w2_ref[...], x2_ref[...], preferred_element_type=jnp.float32)
    d4 = jnp.dot(w1_ref[...], x1_ref[...], preferred_element_type=jnp.float32) + t2
    d11 = jnp.dot(w3_ref[...], x3_ref[...], preferred_element_type=jnp.float32) + t2

    # Bias-shifted accumulation: border / lane-pad pixels have d == 0, so they
    # contribute exactly 0 to both sums; dividing by the padded pixel count in
    # the XLA finalize is exact.
    s4_ref[...] += jnp.sum(d4, axis=-1, keepdims=True)
    s11_ref[...] += jnp.sum(d11, axis=-1, keepdims=True)
    q4_ref[...] += jnp.sum(d4 * d4, axis=-1, keepdims=True)
    q11_ref[...] += jnp.sum(d11 * d11, axis=-1, keepdims=True)


# --------------------------------------------------------------------------
# pass 2: fused conv sums + BN + sigmoid/tanh + pointwise conv4 + product
# --------------------------------------------------------------------------
def _apply_kernel(x1_ref, x2_ref, x3_ref, w1_ref, w2_ref, w3_ref,
                  sc4_ref, c4_ref, sc11_ref, c11_ref, w4_ref, b4_ref, out_ref):
    t2 = jnp.dot(w2_ref[...], x2_ref[...], preferred_element_type=jnp.float32)
    d4 = jnp.dot(w1_ref[...], x1_ref[...], preferred_element_type=jnp.float32) + t2
    d11 = jnp.dot(w3_ref[...], x3_ref[...], preferred_element_type=jnp.float32) + t2

    # bn1(v4), bn3(v11) with conv bias folded into c (review item 5, partial).
    v5 = d4 * sc4_ref[...] + c4_ref[...]
    v12 = d11 * sc11_ref[...] + c11_ref[...]

    # sigmoid in single-tanh form (one EUP op per element, review item 7).
    v7 = 0.5 * jnp.tanh(0.5 * v5) + 0.5
    v8 = 0.5 * jnp.tanh(0.5 * v12) + 0.5
    v9 = jnp.tanh(v8)

    v10 = jnp.dot(w4_ref[...], v9, preferred_element_type=jnp.float32) + b4_ref[...]
    out_ref[...] = (v7 * v10).astype(out_ref.dtype)


def init_params(key):
    ks = jax.random.split(key, 8)
    p = {}
    # conv weights as (Cout, Cin); biases / bn params as (Cout, 1)
    p["w1"] = 0.2 * jax.random.normal(ks[0], (8, 3), jnp.float32)
    p["b1"] = 0.1 * jax.random.normal(ks[1], (8, 1), jnp.float32)
    p["w2"] = 0.2 * jax.random.normal(ks[2], (8, 3), jnp.float32)
    p["b2"] = 0.1 * jax.random.normal(ks[3], (8, 1), jnp.float32)
    p["w3"] = 0.2 * jax.random.normal(ks[4], (8, 3), jnp.float32)
    p["b3"] = 0.1 * jax.random.normal(ks[5], (8, 1), jnp.float32)
    p["w4"] = 0.2 * jax.random.normal(ks[6], (8, 8), jnp.float32)
    p["b4"] = 0.1 * jax.random.normal(ks[7], (8, 1), jnp.float32)
    p["g1"] = jnp.ones((8, 1), jnp.float32)
    p["be1"] = jnp.zeros((8, 1), jnp.float32)
    p["g3"] = jnp.ones((8, 1), jnp.float32)
    p["be3"] = jnp.zeros((8, 1), jnp.float32)
    return p


def model_forward(x1, x2, x3, params):
    """x*: (N, 3, H, W) float32 NCHW.  Returns (N, 8, H+2, W+2)."""
    N, C, H, W = x1.shape
    assert C == 3
    P = H * W
    TP, n_tiles, Pp = _plan_tiles(P)
    Hp, Wp = H + 2, W + 2
    n_total = float(N * Hp * Wp)   # BN statistics run over the padded conv outputs

    # Free reshapes: channels in sublanes, pixels flat in lanes.
    x1f = x1.reshape(N, 3, P)
    x2f = x2.reshape(N, 3, P)
    x3f = x3.reshape(N, 3, P)
    if Pp > P:
        pad = ((0, 0), (0, 0), (0, Pp - P))
        x1f = jnp.pad(x1f, pad)
        x2f = jnp.pad(x2f, pad)
        x3f = jnp.pad(x3f, pad)

    w1, w2, w3, w4 = params["w1"], params["w2"], params["w3"], params["w4"]
    b1, b2, b3, b4 = params["b1"], params["b2"], params["b3"], params["b4"]

    grid = (N, n_tiles)
    xin_spec = pl.BlockSpec((None, 3, TP), lambda n, t: (n, 0, t))

    def cspec(shape):
        return pl.BlockSpec(shape, lambda n, t: tuple(0 for _ in shape))

    # ---- pass 1: per-batch partial BN statistics (megacore over batch) ------
    stat_out = jax.ShapeDtypeStruct((N, 8, 1), jnp.float32)
    stat_spec = pl.BlockSpec((None, 8, 1), lambda n, t: (n, 0, 0))
    s4, s11, q4, q11 = pl.pallas_call(
        _stats_kernel,
        out_shape=(stat_out, stat_out, stat_out, stat_out),
        grid=grid,
        in_specs=[xin_spec, xin_spec, xin_spec,
                  cspec((8, 3)), cspec((8, 3)), cspec((8, 3))],
        out_specs=(stat_spec, stat_spec, stat_spec, stat_spec),
        compiler_params=pltpu.CompilerParams(
            dimension_semantics=("parallel", "arbitrary"),
            vmem_limit_bytes=VMEM_LIMIT),
    )(x1f, x2f, x3f, w1, w2, w3)

    # ---- BN finalize in XLA (tiny): mean/var over the padded conv outputs ---
    m4 = jnp.sum(s4, axis=0) / n_total                          # E[v4 - bias]
    m11 = jnp.sum(s11, axis=0) / n_total
    var4 = jnp.maximum(jnp.sum(q4, axis=0) / n_total - m4 * m4, 0.0)
    var11 = jnp.maximum(jnp.sum(q11, axis=0) / n_total - m11 * m11, 0.0)
    sc4 = params["g1"] * jax.lax.rsqrt(var4 + EPS)              # (8, 1)
    sc11 = params["g3"] * jax.lax.rsqrt(var11 + EPS)
    # bias folded in: bn(v) = (v - mean)*sc + beta = d*sc + (beta - E[d]*sc)
    c4 = params["be1"] - m4 * sc4
    c11 = params["be3"] - m11 * sc11

    # ---- pass 2: normalize + activations + conv4 + product (interior) -------
    out_int = pl.pallas_call(
        _apply_kernel,
        out_shape=jax.ShapeDtypeStruct((N, 8, Pp), jnp.float32),
        grid=grid,
        in_specs=[xin_spec, xin_spec, xin_spec,
                  cspec((8, 3)), cspec((8, 3)), cspec((8, 3)),
                  cspec((8, 1)), cspec((8, 1)), cspec((8, 1)), cspec((8, 1)),
                  cspec((8, 8)), cspec((8, 1))],
        out_specs=pl.BlockSpec((None, 8, TP), lambda n, t: (n, 0, t)),
        compiler_params=pltpu.CompilerParams(
            dimension_semantics=("parallel", "parallel"),
            vmem_limit_bytes=VMEM_LIMIT),
    )(x1f, x2f, x3f, w1, w2, w3, sc4, c4, sc11, c11, w4, b4)

    # ---- border pixels: conv outputs there equal the bias (d = 0), so the
    #      whole border of v7*v10 is one per-channel constant (8 scalars).
    v7_b = jax.nn.sigmoid(c4)
    v9_b = jnp.tanh(jax.nn.sigmoid(c11))
    v10_b = jnp.dot(w4, v9_b) + b4
    border = v7_b * v10_b                                        # (8, 1)

    out = jnp.broadcast_to(border.reshape(1, 8, 1, 1), (N, 8, Hp, Wp))
    interior = out_int[:, :, :P].reshape(N, 8, H, W)
    out = out.at[:, :, 1:-1, 1:-1].set(interior)
    return out


def reference_forward(x1, x2, x3, params):
    """Pure-JAX reference mirroring the (repaired) PyTorch forward."""
    def conv1x1_pad(x, w, b):
        xp = jnp.pad(x, ((0, 0), (0, 0), (1, 1), (1, 1)))
        return jnp.einsum("oc,nchw->nohw", w, xp) + b.reshape(1, 8, 1, 1)

    def bn(x, g, b):
        mean = x.mean(axis=(0, 2, 3), keepdims=True)
        var = x.var(axis=(0, 2, 3), keepdims=True)     # biased, training mode
        return ((x - mean) * jax.lax.rsqrt(var + EPS) * g.reshape(1, 8, 1, 1)
                + b.reshape(1, 8, 1, 1))

    v1 = conv1x1_pad(x1, params["w1"], params["b1"])
    v2 = conv1x1_pad(x2, params["w2"], params["b2"])
    v3 = conv1x1_pad(x3, params["w3"], params["b3"])
    v4 = v1 + v2
    v11 = v2 + v3
    v5 = bn(v4, params["g1"], params["be1"])
    v12 = bn(v11, params["g3"], params["be3"])
    v7 = jax.nn.sigmoid(v5)
    v9 = jnp.tanh(jax.nn.sigmoid(v12))
    v10 = jnp.einsum("oc,nchw->nohw", params["w4"], v9) + params["b4"].reshape(1, 8, 1, 1)
    return v7 * v10


if __name__ == "__main__":
    key = jax.random.PRNGKey(0)
    kx1, kx2, kx3, kp = jax.random.split(key, 4)

    N, C, H, W = 2, 3, 16, 16
    x1 = jax.random.normal(kx1, (N, C, H, W), jnp.float32)
    x2 = jax.random.normal(kx2, (N, C, H, W), jnp.float32)
    x3 = jax.random.normal(kx3, (N, C, H, W), jnp.float32)
    params = init_params(kp)

    fwd = jax.jit(model_forward)
    out = fwd(x1, x2, x3, params)
    jax.block_until_ready(out)

    assert out.shape == (N, 8, H + 2, W + 2), out.shape
    assert bool(jnp.all(jnp.isfinite(out)))

    ref = reference_forward(x1, x2, x3, params)
    err = float(jnp.max(jnp.abs(out - ref)))
    assert err < 2e-2, f"max abs err vs reference: {err}"

    print("KERNEL_OK")
</pallas_src>

<mosaic_0001>
module attributes {stable_mosaic.version = 11 : i64} {
  func.func @_stats_kernel(%arg0: i32, %arg1: i32, %arg2: memref<1x3x256xf32, #tpu.memory_space<vmem>>, %arg3: memref<1x3x256xf32, #tpu.memory_space<vmem>>, %arg4: memref<1x3x256xf32, #tpu.memory_space<vmem>>, %arg5: memref<8x3xf32, #tpu.memory_space<vmem>>, %arg6: memref<8x3xf32, #tpu.memory_space<vmem>>, %arg7: memref<8x3xf32, #tpu.memory_space<vmem>>, %arg8: memref<1x8x1xf32, #tpu.memory_space<vmem>>, %arg9: memref<1x8x1xf32, #tpu.memory_space<vmem>>, %arg10: memref<1x8x1xf32, #tpu.memory_space<vmem>>, %arg11: memref<1x8x1xf32, #tpu.memory_space<vmem>>) attributes {dimension_semantics = [#tpu.dimension_semantics<parallel>, #tpu.dimension_semantics<arbitrary>], iteration_bounds = array<i64: 2, 1>, scalar_prefetch = 0 : i64, scratch_operands = 0 : i64, tpu.core_type = #tpu.core_type<tc>, window_params = [{transform_indices = @transform_0, window_bounds = array<i64: 1, 3, 256>}, {transform_indices = @transform_1, window_bounds = array<i64: 1, 3, 256>}, {transform_indices = @transform_2, window_bounds = array<i64: 1, 3, 256>}, {pipeline_mode = #tpu.pipeline_mode<synchronous>, transform_indices = @transform_3, window_bounds = array<i64: 8, 3>}, {pipeline_mode = #tpu.pipeline_mode<synchronous>, transform_indices = @transform_4, window_bounds = array<i64: 8, 3>}, {pipeline_mode = #tpu.pipeline_mode<synchronous>, transform_indices = @transform_5, window_bounds = array<i64: 8, 3>}, {transform_indices = @transform_6, window_bounds = array<i64: 1, 8, 1>}, {transform_indices = @transform_7, window_bounds = array<i64: 1, 8, 1>}, {transform_indices = @transform_8, window_bounds = array<i64: 1, 8, 1>}, {transform_indices = @transform_9, window_bounds = array<i64: 1, 8, 1>}]} {
    %c0_i32 = arith.constant 0 : i32
    %0 = arith.cmpi eq, %arg1, %c0_i32 : i32
    %1 = arith.extui %0 : i1 to i32
    %c0_i32_0 = arith.constant 0 : i32
    %2 = arith.cmpi ne, %1, %c0_i32_0 : i32
    scf.if %2 {
      %cst_45 = arith.constant 0.000000e+00 : f32
      %51 = vector.broadcast %cst_45 : f32 to vector<8x1xf32>
      %c0_46 = arith.constant 0 : index
      %c0_47 = arith.constant 0 : index
      %c0_48 = arith.constant 0 : index
      %52 = vector.load %arg8[%c0_46, %c0_47, %c0_48] : memref<1x8x1xf32, #tpu.memory_space<vmem>>, vector<1x8x1xf32>
      %53 = vector.shape_cast %52 : vector<1x8x1xf32> to vector<8x1xf32>
      %54 = vector.shape_cast %51 : vector<8x1xf32> to vector<1x8x1xf32>
      tpu.vector_store %arg8[%c0_46, %c0_47, %c0_48], %54 {strides = array<i32>} : memref<1x8x1xf32, #tpu.memory_space<vmem>>, vector<1x8x1xf32>,
      %cst_49 = arith.constant 0.000000e+00 : f32
      %55 = vector.broadcast %cst_49 : f32 to vector<8x1xf32>
      %c0_50 = arith.constant 0 : index
      %c0_51 = arith.constant 0 : index
      %c0_52 = arith.constant 0 : index
      %56 = vector.load %arg9[%c0_50, %c0_51, %c0_52] : memref<1x8x1xf32, #tpu.memory_space<vmem>>, vector<1x8x1xf32>
      %57 = vector.shape_cast %56 : vector<1x8x1xf32> to vector<8x1xf32>
      %58 = vector.shape_cast %55 : vector<8x1xf32> to vector<1x8x1xf32>
      tpu.vector_store %arg9[%c0_50, %c0_51, %c0_52], %58 {strides = array<i32>} : memref<1x8x1xf32, #tpu.memory_space<vmem>>, vector<1x8x1xf32>,
      %cst_53 = arith.constant 0.000000e+00 : f32
      %59 = vector.broadcast %cst_53 : f32 to vector<8x1xf32>
      %c0_54 = arith.constant 0 : index
      %c0_55 = arith.constant 0 : index
      %c0_56 = arith.constant 0 : index
      %60 = vector.load %arg10[%c0_54, %c0_55, %c0_56] : memref<1x8x1xf32, #tpu.memory_space<vmem>>, vector<1x8x1xf32>
      %61 = vector.shape_cast %60 : vector<1x8x1xf32> to vector<8x1xf32>
      %62 = vector.shape_cast %59 : vector<8x1xf32> to vector<1x8x1xf32>
      tpu.vector_store %arg10[%c0_54, %c0_55, %c0_56], %62 {strides = array<i32>} : memref<1x8x1xf32, #tpu.memory_space<vmem>>, vector<1x8x1xf32>,
      %cst_57 = arith.constant 0.000000e+00 : f32
      %63 = vector.broadcast %cst_57 : f32 to vector<8x1xf32>
      %c0_58 = arith.constant 0 : index
      %c0_59 = arith.constant 0 : index
      %c0_60 = arith.constant 0 : index
      %64 = vector.load %arg11[%c0_58, %c0_59, %c0_60] : memref<1x8x1xf32, #tpu.memory_space<vmem>>, vector<1x8x1xf32>
      %65 = vector.shape_cast %64 : vector<1x8x1xf32> to vector<8x1xf32>
      %66 = vector.shape_cast %63 : vector<8x1xf32> to vector<1x8x1xf32>
      tpu.vector_store %arg11[%c0_58, %c0_59, %c0_60], %66 {strides = array<i32>} : memref<1x8x1xf32, #tpu.memory_space<vmem>>, vector<1x8x1xf32>,
    } else {
    }
    %c0 = arith.constant 0 : index
    %c0_1 = arith.constant 0 : index
    %3 = vector.load %arg6[%c0, %c0_1] : memref<8x3xf32, #tpu.memory_space<vmem>>, vector<8x3xf32>
    %c0_2 = arith.constant 0 : index
    %c0_3 = arith.constant 0 : index
    %c0_4 = arith.constant 0 : index
    %4 = vector.load %arg3[%c0_2, %c0_3, %c0_4] : memref<1x3x256xf32, #tpu.memory_space<vmem>>, vector<1x3x256xf32>
    %5 = vector.shape_cast %4 : vector<1x3x256xf32> to vector<3x256xf32>
    %cst = arith.constant dense<0.000000e+00> : vector<8x256xf32>
    %6 = tpu.matmul %3, %5, %cst {dimension_numbers = #tpu.dot_dimension_numbers<[1], [0], [0], [1], [0, 0, 1, 1], [], []>} : vector<8x3xf32>, vector<3x256xf32>, vector<8x256xf32> -> vector<8x256xf32>
    %c0_5 = arith.constant 0 : index
    %c0_6 = arith.constant 0 : index
    %7 = vector.load %arg5[%c0_5, %c0_6] : memref<8x3xf32, #tpu.memory_space<vmem>>, vector<8x3xf32>
    %c0_7 = arith.constant 0 : index
    %c0_8 = arith.constant 0 : index
    %c0_9 = arith.constant 0 : index
    %8 = vector.load %arg2[%c0_7, %c0_8, %c0_9] : memref<1x3x256xf32, #tpu.memory_space<vmem>>, vector<1x3x256xf32>
    %9 = vector.shape_cast %8 : vector<1x3x256xf32> to vector<3x256xf32>
    %cst_10 = arith.constant dense<0.000000e+00> : vector<8x256xf32>
    %10 = tpu.matmul %7, %9, %cst_10 {dimension_numbers = #tpu.dot_dimension_numbers<[1], [0], [0], [1], [0, 0, 1, 1], [], []>} : vector<8x3xf32>, vector<3x256xf32>, vector<8x256xf32> -> vector<8x256xf32>
    %11 = arith.addf %10, %6 : vector<8x256xf32>
    %c0_11 = arith.constant 0 : index
    %c0_12 = arith.constant 0 : index
    %12 = vector.load %arg7[%c0_11, %c0_12] : memref<8x3xf32, #tpu.memory_space<vmem>>, vector<8x3xf32>
    %c0_13 = arith.constant 0 : index
    %c0_14 = arith.constant 0 : index
    %c0_15 = arith.constant 0 : index
    %13 = vector.load %arg4[%c0_13, %c0_14, %c0_15] : memref<1x3x256xf32, #tpu.memory_space<vmem>>, vector<1x3x256xf32>
    %14 = vector.shape_cast %13 : vector<1x3x256xf32> to vector<3x256xf32>
    %cst_16 = arith.constant dense<0.000000e+00> : vector<8x256xf32>
    %15 = tpu.matmul %12, %14, %cst_16 {dimension_numbers = #tpu.dot_dimension_numbers<[1], [0], [0], [1], [0, 0, 1, 1], [], []>} : vector<8x3xf32>, vector<3x256xf32>, vector<8x256xf32> -> vector<8x256xf32>
    %16 = arith.addf %15, %6 : vector<8x256xf32>
    %c0_17 = arith.constant 0 : index
    %c0_18 = arith.constant 0 : index
    %c0_19 = arith.constant 0 : index
    %17 = vector.load %arg8[%c0_17, %c0_18, %c0_19] : memref<1x8x1xf32, #tpu.memory_space<vmem>>, vector<1x8x1xf32>
    %18 = vector.shape_cast %17 : vector<1x8x1xf32> to vector<8x1xf32>
    %cst_20 = arith.constant dense<0.000000e+00> : vector<8xf32>
    %19 = vector.multi_reduction <add>, %11, %cst_20 [1] : vector<8x256xf32> to vector<8xf32>
    %20 = vector.shape_cast %19 : vector<8xf32> to vector<8x1xf32>
    %21 = arith.addf %18, %20 : vector<8x1xf32>
    %c0_21 = arith.constant 0 : index
    %c0_22 = arith.constant 0 : index
    %c0_23 = arith.constant 0 : index
    %22 = vector.load %arg8[%c0_21, %c0_22, %c0_23] : memref<1x8x1xf32, #tpu.memory_space<vmem>>, vector<1x8x1xf32>
    %23 = vector.shape_cast %22 : vector<1x8x1xf32> to vector<8x1xf32>
    %24 = vector.shape_cast %21 : vector<8x1xf32> to vector<1x8x1xf32>
    tpu.vector_store %arg8[%c0_21, %c0_22, %c0_23], %24 {strides = array<i32>} : memref<1x8x1xf32, #tpu.memory_space<vmem>>, vector<1x8x1xf32>,
    %c0_24 = arith.constant 0 : index
    %c0_25 = arith.constant 0 : index
    %c0_26 = arith.constant 0 : index
    %25 = vector.load %arg9[%c0_24, %c0_25, %c0_26] : memref<1x8x1xf32, #tpu.memory_space<vmem>>, vector<1x8x1xf32>
    %26 = vector.shape_cast %25 : vector<1x8x1xf32> to vector<8x1xf32>
    %cst_27 = arith.constant dense<0.000000e+00> : vector<8xf32>
    %27 = vector.multi_reduction <add>, %16, %cst_27 [1] : vector<8x256xf32> to vector<8xf32>
    %28 = vector.shape_cast %27 : vector<8xf32> to vector<8x1xf32>
    %29 = arith.addf %26, %28 : vector<8x1xf32>
    %c0_28 = arith.constant 0 : index
    %c0_29 = arith.constant 0 : index
    %c0_30 = arith.constant 0 : index
    %30 = vector.load %arg9[%c0_28, %c0_29, %c0_30] : memref<1x8x1xf32, #tpu.memory_space<vmem>>, vector<1x8x1xf32>
    %31 = vector.shape_cast %30 : vector<1x8x1xf32> to vector<8x1xf32>
    %32 = vector.shape_cast %29 : vector<8x1xf32> to vector<1x8x1xf32>
    tpu.vector_store %arg9[%c0_28, %c0_29, %c0_30], %32 {strides = array<i32>} : memref<1x8x1xf32, #tpu.memory_space<vmem>>, vector<1x8x1xf32>,
    %c0_31 = arith.constant 0 : index
    %c0_32 = arith.constant 0 : index
    %c0_33 = arith.constant 0 : index
    %33 = vector.load %arg10[%c0_31, %c0_32, %c0_33] : memref<1x8x1xf32, #tpu.memory_space<vmem>>, vector<1x8x1xf32>
    %34 = vector.shape_cast %33 : vector<1x8x1xf32> to vector<8x1xf32>
    %35 = arith.mulf %11, %11 : vector<8x256xf32>
    %cst_34 = arith.constant dense<0.000000e+00> : vector<8xf32>
    %36 = vector.multi_reduction <add>, %35, %cst_34 [1] : vector<8x256xf32> to vector<8xf32>
    %37 = vector.shape_cast %36 : vector<8xf32> to vector<8x1xf32>
    %38 = arith.addf %34, %37 : vector<8x1xf32>
    %c0_35 = arith.constant 0 : index
    %c0_36 = arith.constant 0 : index
    %c0_37 = arith.constant 0 : index
    %39 = vector.load %arg10[%c0_35, %c0_36, %c0_37] : memref<1x8x1xf32, #tpu.memory_space<vmem>>, vector<1x8x1xf32>
    %40 = vector.shape_cast %39 : vector<1x8x1xf32> to vector<8x1xf32>
    %41 = vector.shape_cast %38 : vector<8x1xf32> to vector<1x8x1xf32>
    tpu.vector_store %arg10[%c0_35, %c0_36, %c0_37], %41 {strides = array<i32>} : memref<1x8x1xf32, #tpu.memory_space<vmem>>, vector<1x8x1xf32>,
    %c0_38 = arith.constant 0 : index
    %c0_39 = arith.constant 0 : index
    %c0_40 = arith.constant 0 : index
    %42 = vector.load %arg11[%c0_38, %c0_39, %c0_40] : memref<1x8x1xf32, #tpu.memory_space<vmem>>, vector<1x8x1xf32>
    %43 = vector.shape_cast %42 : vector<1x8x1xf32> to vector<8x1xf32>
    %44 = arith.mulf %16, %16 : vector<8x256xf32>
    %cst_41 = arith.constant dense<0.000000e+00> : vector<8xf32>
    %45 = vector.multi_reduction <add>, %44, %cst_41 [1] : vector<8x256xf32> to vector<8xf32>
    %46 = vector.shape_cast %45 : vector<8xf32> to vector<8x1xf32>
    %47 = arith.addf %43, %46 : vector<8x1xf32>
    %c0_42 = arith.constant 0 : index
    %c0_43 = arith.constant 0 : index
    %c0_44 = arith.constant 0 : index
    %48 = vector.load %arg11[%c0_42, %c0_43, %c0_44] : memref<1x8x1xf32, #tpu.memory_space<vmem>>, vector<1x8x1xf32>
    %49 = vector.shape_cast %48 : vector<1x8x1xf32> to vector<8x1xf32>
    %50 = vector.shape_cast %47 : vector<8x1xf32> to vector<1x8x1xf32>
    tpu.vector_store %arg11[%c0_42, %c0_43, %c0_44], %50 {strides = array<i32>} : memref<1x8x1xf32, #tpu.memory_space<vmem>>, vector<1x8x1xf32>,
    return
  }
  func.func @transform_0(%arg0: i32, %arg1: i32) -> (i32, i32, i32) {
    %c0_i32 = arith.constant 0 : i32
    %c0_i32_0 = arith.constant 0 : i32
    return %arg0, %c0_i32, %arg1 : i32, i32, i32
  }
  func.func @transform_1(%arg0: i32, %arg1: i32) -> (i32, i32, i32) {
    %c0_i32 = arith.constant 0 : i32
    %c0_i32_0 = arith.constant 0 : i32
    return %arg0, %c0_i32, %arg1 : i32, i32, i32
  }
  func.func @transform_2(%arg0: i32, %arg1: i32) -> (i32, i32, i32) {
    %c0_i32 = arith.constant 0 : i32
    %c0_i32_0 = arith.constant 0 : i32
    return %arg0, %c0_i32, %arg1 : i32, i32, i32
  }
  func.func @transform_3(%arg0: i32, %arg1: i32) -> (i32, i32) {
    %c0_i32 = arith.constant 0 : i32
    %c0_i32_0 = arith.constant 0 : i32
    %c0_i32_1 = arith.constant 0 : i32
    return %c0_i32, %c0_i32_0 : i32, i32
  }
  func.func @transform_4(%arg0: i32, %arg1: i32) -> (i32, i32) {
    %c0_i32 = arith.constant 0 : i32
    %c0_i32_0 = arith.constant 0 : i32
    %c0_i32_1 = arith.constant 0 : i32
    return %c0_i32, %c0_i32_0 : i32, i32
  }
  func.func @transform_5(%arg0: i32, %arg1: i32) -> (i32, i32) {
    %c0_i32 = arith.constant 0 : i32
    %c0_i32_0 = arith.constant 0 : i32
    %c0_i32_1 = arith.constant 0 : i32
    return %c0_i32, %c0_i32_0 : i32, i32
  }
  func.func @transform_6(%arg0: i32, %arg1: i32) -> (i32, i32, i32) {
    %c0_i32 = arith.constant 0 : i32
    %c0_i32_0 = arith.constant 0 : i32
    %c0_i32_1 = arith.constant 0 : i32
    return %arg0, %c0_i32, %c0_i32_0 : i32, i32, i32
  }
  func.func @transform_7(%arg0: i32, %arg1: i32) -> (i32, i32, i32) {
    %c0_i32 = arith.constant 0 : i32
    %c0_i32_0 = arith.constant 0 : i32
    %c0_i32_1 = arith.constant 0 : i32
    return %arg0, %c0_i32, %c0_i32_0 : i32, i32, i32
  }
  func.func @transform_8(%arg0: i32, %arg1: i32) -> (i32, i32, i32) {
    %c0_i32 = arith.constant 0 : i32
    %c0_i32_0 = arith.constant 0 : i32
    %c0_i32_1 = arith.constant 0 : i32
    return %arg0, %c0_i32, %c0_i32_0 : i32, i32, i32
  }
  func.func @transform_9(%arg0: i32, %arg1: i32) -> (i32, i32, i32) {
    %c0_i32 = arith.constant 0 : i32
    %c0_i32_0 = arith.constant 0 : i32
    %c0_i32_1 = arith.constant 0 : i32
    return %arg0, %c0_i32, %c0_i32_0 : i32, i32, i32
  }
}

module attributes {stable_mosaic.version = 11 : i64} {
  func.func @_apply_kernel(%arg0: i32, %arg1: i32, %arg2: memref<1x3x256xf32, #tpu.memory_space<vmem>>, %arg3: memref<1x3x256xf32, #tpu.memory_space<vmem>>, %arg4: memref<1x3x256xf32, #tpu.memory_space<vmem>>, %arg5: memref<8x3xf32, #tpu.memory_space<vmem>>, %arg6: memref<8x3xf32, #tpu.memory_space<vmem>>, %arg7: memref<8x3xf32, #tpu.memory_space<vmem>>, %arg8: memref<8x1xf32, #tpu.memory_space<vmem>>, %arg9: memref<8x1xf32, #tpu.memory_space<vmem>>, %arg10: memref<8x1xf32, #tpu.memory_space<vmem>>, %arg11: memref<8x1xf32, #tpu.memory_space<vmem>>, %arg12: memref<8x8xf32, #tpu.memory_space<vmem>>, %arg13: memref<8x1xf32, #tpu.memory_space<vmem>>, %arg14: memref<1x8x256xf32, #tpu.memory_space<vmem>>) attributes {dimension_semantics = [#tpu.dimension_semantics<parallel>, #tpu.dimension_semantics<parallel>], iteration_bounds = array<i64: 2, 1>, scalar_prefetch = 0 : i64, scratch_operands = 0 : i64, tpu.core_type = #tpu.core_type<tc>, window_params = [{transform_indices = @transform_0, window_bounds = array<i64: 1, 3, 256>}, {transform_indices = @transform_1, window_bounds = array<i64: 1, 3, 256>}, {transform_indices = @transform_2, window_bounds = array<i64: 1, 3, 256>}, {pipeline_mode = #tpu.pipeline_mode<synchronous>, transform_indices = @transform_3, window_bounds = array<i64: 8, 3>}, {pipeline_mode = #tpu.pipeline_mode<synchronous>, transform_indices = @transform_4, window_bounds = array<i64: 8, 3>}, {pipeline_mode = #tpu.pipeline_mode<synchronous>, transform_indices = @transform_5, window_bounds = array<i64: 8, 3>}, {pipeline_mode = #tpu.pipeline_mode<synchronous>, transform_indices = @transform_6, window_bounds = array<i64: 8, 1>}, {pipeline_mode = #tpu.pipeline_mode<synchronous>, transform_indices = @transform_7, window_bounds = array<i64: 8, 1>}, {pipeline_mode = #tpu.pipeline_mode<synchronous>, transform_indices = @transform_8, window_bounds = array<i64: 8, 1>}, {pipeline_mode = #tpu.pipeline_mode<synchronous>, transform_indices = @transform_9, window_bounds = array<i64: 8, 1>}, {pipeline_mode = #tpu.pipeline_mode<synchronous>, transform_indices = @transform_10, window_bounds = array<i64: 8, 8>}, {pipeline_mode = #tpu.pipeline_mode<synchronous>, transform_indices = @transform_11, window_bounds = array<i64: 8, 1>}, {transform_indices = @transform_12, window_bounds = array<i64: 1, 8, 256>}]} {
    %c0 = arith.constant 0 : index
    %c0_0 = arith.constant 0 : index
    %0 = vector.load %arg6[%c0, %c0_0] : memref<8x3xf32, #tpu.memory_space<vmem>>, vector<8x3xf32>
    %c0_1 = arith.constant 0 : index
    %c0_2 = arith.constant 0 : index
    %c0_3 = arith.constant 0 : index
    %1 = vector.load %arg3[%c0_1, %c0_2, %c0_3] : memref<1x3x256xf32, #tpu.memory_space<vmem>>, vector<1x3x256xf32>
    %2 = vector.shape_cast %1 : vector<1x3x256xf32> to vector<3x256xf32>
    %cst = arith.constant dense<0.000000e+00> : vector<8x256xf32>
    %3 = tpu.matmul %0, %2, %cst {dimension_numbers = #tpu.dot_dimension_numbers<[1], [0], [0], [1], [0, 0, 1, 1], [], []>} : vector<8x3xf32>, vector<3x256xf32>, vector<8x256xf32> -> vector<8x256xf32>
    %c0_4 = arith.constant 0 : index
    %c0_5 = arith.constant 0 : index
    %4 = vector.load %arg5[%c0_4, %c0_5] : memref<8x3xf32, #tpu.memory_space<vmem>>, vector<8x3xf32>
    %c0_6 = arith.constant 0 : index
    %c0_7 = arith.constant 0 : index
    %c0_8 = arith.constant 0 : index
    %5 = vector.load %arg2[%c0_6, %c0_7, %c0_8] : memref<1x3x256xf32, #tpu.memory_space<vmem>>, vector<1x3x256xf32>
    %6 = vector.shape_cast %5 : vector<1x3x256xf32> to vector<3x256xf32>
    %cst_9 = arith.constant dense<0.000000e+00> : vector<8x256xf32>
    %7 = tpu.matmul %4, %6, %cst_9 {dimension_numbers = #tpu.dot_dimension_numbers<[1], [0], [0], [1], [0, 0, 1, 1], [], []>} : vector<8x3xf32>, vector<3x256xf32>, vector<8x256xf32> -> vector<8x256xf32>
    %8 = arith.addf %7, %3 : vector<8x256xf32>
    %c0_10 = arith.constant 0 : index
    %c0_11 = arith.constant 0 : index
    %9 = vector.load %arg7[%c0_10, %c0_11] : memref<8x3xf32, #tpu.memory_space<vmem>>, vector<8x3xf32>
    %c0_12 = arith.constant 0 : index
    %c0_13 = arith.constant 0 : index
    %c0_14 = arith.constant 0 : index
    %10 = vector.load %arg4[%c0_12, %c0_13, %c0_14] : memref<1x3x256xf32, #tpu.memory_space<vmem>>, vector<1x3x256xf32>
    %11 = vector.shape_cast %10 : vector<1x3x256xf32> to vector<3x256xf32>
    %cst_15 = arith.constant dense<0.000000e+00> : vector<8x256xf32>
    %12 = tpu.matmul %9, %11, %cst_15 {dimension_numbers = #tpu.dot_dimension_numbers<[1], [0], [0], [1], [0, 0, 1, 1], [], []>} : vector<8x3xf32>, vector<3x256xf32>, vector<8x256xf32> -> vector<8x256xf32>
    %13 = arith.addf %12, %3 : vector<8x256xf32>
    %c0_16 = arith.constant 0 : index
    %c0_17 = arith.constant 0 : index
    %14 = vector.load %arg8[%c0_16, %c0_17] : memref<8x1xf32, #tpu.memory_space<vmem>>, vector<8x1xf32>
    %15 = vector.broadcast %14 : vector<8x1xf32> to vector<8x256xf32>
    %16 = arith.mulf %8, %15 : vector<8x256xf32>
    %c0_18 = arith.constant 0 : index
    %c0_19 = arith.constant 0 : index
    %17 = vector.load %arg9[%c0_18, %c0_19] : memref<8x1xf32, #tpu.memory_space<vmem>>, vector<8x1xf32>
    %18 = vector.broadcast %17 : vector<8x1xf32> to vector<8x256xf32>
    %19 = arith.addf %16, %18 : vector<8x256xf32>
    %c0_20 = arith.constant 0 : index
    %c0_21 = arith.constant 0 : index
    %20 = vector.load %arg10[%c0_20, %c0_21] : memref<8x1xf32, #tpu.memory_space<vmem>>, vector<8x1xf32>
    %21 = vector.broadcast %20 : vector<8x1xf32> to vector<8x256xf32>
    %22 = arith.mulf %13, %21 : vector<8x256xf32>
    %c0_22 = arith.constant 0 : index
    %c0_23 = arith.constant 0 : index
    %23 = vector.load %arg11[%c0_22, %c0_23] : memref<8x1xf32, #tpu.memory_space<vmem>>, vector<8x1xf32>
    %24 = vector.broadcast %23 : vector<8x1xf32> to vector<8x256xf32>
    %25 = arith.addf %22, %24 : vector<8x256xf32>
    %cst_24 = arith.constant 5.000000e-01 : f32
    %26 = vector.broadcast %cst_24 : f32 to vector<8x256xf32>
    %27 = arith.mulf %26, %19 : vector<8x256xf32>
    %28 = math.tanh %27 : vector<8x256xf32>
    %cst_25 = arith.constant 5.000000e-01 : f32
    %29 = vector.broadcast %cst_25 : f32 to vector<8x256xf32>
    %30 = arith.mulf %29, %28 : vector<8x256xf32>
    %cst_26 = arith.constant 5.000000e-01 : f32
    %31 = vector.broadcast %cst_26 : f32 to vector<8x256xf32>
    %32 = arith.addf %30, %31 : vector<8x256xf32>
    %cst_27 = arith.constant 5.000000e-01 : f32
    %33 = vector.broadcast %cst_27 : f32 to vector<8x256xf32>
    %34 = arith.mulf %33, %25 : vector<8x256xf32>
    %35 = math.tanh %34 : vector<8x256xf32>
    %cst_28 = arith.constant 5.000000e-01 : f32
    %36 = vector.broadcast %cst_28 : f32 to vector<8x256xf32>
    %37 = arith.mulf %36, %35 : vector<8x256xf32>
    %cst_29 = arith.constant 5.000000e-01 : f32
    %38 = vector.broadcast %cst_29 : f32 to vector<8x256xf32>
    %39 = arith.addf %37, %38 : vector<8x256xf32>
    %40 = math.tanh %39 : vector<8x256xf32>
    %c0_30 = arith.constant 0 : index
    %c0_31 = arith.constant 0 : index
    %41 = vector.load %arg12[%c0_30, %c0_31] : memref<8x8xf32, #tpu.memory_space<vmem>>, vector<8x8xf32>
    %cst_32 = arith.constant dense<0.000000e+00> : vector<8x256xf32>
    %42 = tpu.matmul %41, %40, %cst_32 {dimension_numbers = #tpu.dot_dimension_numbers<[1], [0], [0], [1], [0, 0, 1, 1], [], []>} : vector<8x8xf32>, vector<8x256xf32>, vector<8x256xf32> -> vector<8x256xf32>
    %c0_33 = arith.constant 0 : index
    %c0_34 = arith.constant 0 : index
    %43 = vector.load %arg13[%c0_33, %c0_34] : memref<8x1xf32, #tpu.memory_space<vmem>>, vector<8x1xf32>
    %44 = vector.broadcast %43 : vector<8x1xf32> to vector<8x256xf32>
    %45 = arith.addf %42, %44 : vector<8x256xf32>
    %46 = arith.mulf %32, %45 : vector<8x256xf32>
    %c0_35 = arith.constant 0 : index
    %c0_36 = arith.constant 0 : index
    %c0_37 = arith.constant 0 : index
    %47 = vector.load %arg14[%c0_35, %c0_36, %c0_37] : memref<1x8x256xf32, #tpu.memory_space<vmem>>, vector<1x8x256xf32>
    %48 = vector.shape_cast %47 : vector<1x8x256xf32> to vector<8x256xf32>
    %49 = vector.shape_cast %46 : vector<8x256xf32> to vector<1x8x256xf32>
    tpu.vector_store %arg14[%c0_35, %c0_36, %c0_37], %49 {strides = array<i32>} : memref<1x8x256xf32, #tpu.memory_space<vmem>>, vector<1x8x256xf32>,
    return
  }
  func.func @transform_0(%arg0: i32, %arg1: i32) -> (i32, i32, i32) {
    %c0_i32 = arith.constant 0 : i32
    %c0_i32_0 = arith.constant 0 : i32
    return %arg0, %c0_i32, %arg1 : i32, i32, i32
  }
  func.func @transform_1(%arg0: i32, %arg1: i32) -> (i32, i32, i32) {
    %c0_i32 = arith.constant 0 : i32
    %c0_i32_0 = arith.constant 0 : i32
    return %arg0, %c0_i32, %arg1 : i32, i32, i32
  }
  func.func @transform_2(%arg0: i32, %arg1: i32) -> (i32, i32, i32) {
    %c0_i32 = arith.constant 0 : i32
    %c0_i32_0 = arith.constant 0 : i32
    return %arg0, %c0_i32, %arg1 : i32, i32, i32
  }
  func.func @transform_3(%arg0: i32, %arg1: i32) -> (i32, i32) {
    %c0_i32 = arith.constant 0 : i32
    %c0_i32_0 = arith.constant 0 : i32
    %c0_i32_1 = arith.constant 0 : i32
    return %c0_i32, %c0_i32_0 : i32, i32
  }
  func.func @transform_4(%arg0: i32, %arg1: i32) -> (i32, i32) {
    %c0_i32 = arith.constant 0 : i32
    %c0_i32_0 = arith.constant 0 : i32
    %c0_i32_1 = arith.constant 0 : i32
    return %c0_i32, %c0_i32_0 : i32, i32
  }
  func.func @transform_5(%arg0: i32, %arg1: i32) -> (i32, i32) {
    %c0_i32 = arith.constant 0 : i32
    %c0_i32_0 = arith.constant 0 : i32
    %c0_i32_1 = arith.constant 0 : i32
    return %c0_i32, %c0_i32_0 : i32, i32
  }
  func.func @transform_6(%arg0: i32, %arg1: i32) -> (i32, i32) {
    %c0_i32 = arith.constant 0 : i32
    %c0_i32_0 = arith.constant 0 : i32
    %c0_i32_1 = arith.constant 0 : i32
    return %c0_i32, %c0_i32_0 : i32, i32
  }
  func.func @transform_7(%arg0: i32, %arg1: i32) -> (i32, i32) {
    %c0_i32 = arith.constant 0 : i32
    %c0_i32_0 = arith.constant 0 : i32
    %c0_i32_1 = arith.constant 0 : i32
    return %c0_i32, %c0_i32_0 : i32, i32
  }
  func.func @transform_8(%arg0: i32, %arg1: i32) -> (i32, i32) {
    %c0_i32 = arith.constant 0 : i32
    %c0_i32_0 = arith.constant 0 : i32
    %c0_i32_1 = arith.constant 0 : i32
    return %c0_i32, %c0_i32_0 : i32, i32
  }
  func.func @transform_9(%arg0: i32, %arg1: i32) -> (i32, i32) {
    %c0_i32 = arith.constant 0 : i32
    %c0_i32_0 = arith.constant 0 : i32
    %c0_i32_1 = arith.constant 0 : i32
    return %c0_i32, %c0_i32_0 : i32, i32
  }
  func.func @transform_10(%arg0: i32, %arg1: i32) -> (i32, i32) {
    %c0_i32 = arith.constant 0 : i32
    %c0_i32_0 = arith.constant 0 : i32
    %c0_i32_1 = arith.constant 0 : i32
    return %c0_i32, %c0_i32_0 : i32, i32
  }
  func.func @transform_11(%arg0: i32, %arg1: i32) -> (i32, i32) {
    %c0_i32 = arith.constant 0 : i32
    %c0_i32_0 = arith.constant 0 : i32
    %c0_i32_1 = arith.constant 0 : i32
    return %c0_i32, %c0_i32_0 : i32, i32
  }
  func.func @transform_12(%arg0: i32, %arg1: i32) -> (i32, i32, i32) {
    %c0_i32 = arith.constant 0 : i32
    %c0_i32_0 = arith.constant 0 : i32
    return %arg0, %c0_i32, %arg1 : i32, i32, i32
  }
}

</mosaic_0001>

<llo_original>
// kernel: model_forward.3
$region0: #{model_forward.3}
  #allocation0 [shape = 'u32[]', space=smem, size = 0x4, offset = 0x4, fixed_abs, tag = 'smem constant byte address 0x4 - core index']
  #allocation1 [shape = 'u32[72,128]{1,0:T(1,128)}', space=vmem, size = 0x9000, scoped, tag = 'internal scratch']
  %s0 = inlined_call_operand.vmem [shape: f32[2,3,256], index: 0, kind: input, shape index: {}]
  %s1 = inlined_call_operand.vmem [shape: f32[2,3,256], index: 1, kind: input, shape index: {}]
  %s2 = inlined_call_operand.vmem [shape: f32[2,3,256], index: 2, kind: input, shape index: {}]
  %s3 = inlined_call_operand.vmem [shape: f32[8,3], index: 3, kind: input, shape index: {}]
  %s4 = inlined_call_operand.vmem [shape: f32[8,3], index: 4, kind: input, shape index: {}]
  %s5 = inlined_call_operand.vmem [shape: f32[8,3], index: 5, kind: input, shape index: {}]
  %s6 = inlined_call_operand.vmem [shape: f32[8,1], index: 6, kind: input, shape index: {}]
  %s7 = inlined_call_operand.vmem [shape: f32[8,1], index: 7, kind: input, shape index: {}]
  %s8 = inlined_call_operand.vmem [shape: f32[8,1], index: 8, kind: input, shape index: {}]
  %s9 = inlined_call_operand.vmem [shape: f32[8,1], index: 9, kind: input, shape index: {}]
  %s10 = inlined_call_operand.vmem [shape: f32[8,8], index: 10, kind: input, shape index: {}]
  %s11 = inlined_call_operand.vmem [shape: f32[8,1], index: 11, kind: input, shape index: {}]
  %s12 = inlined_call_operand.vmem [shape: f32[2,8,256], index: 12, kind: output, shape index: {}]
  %s13 = sld [smem:[#allocation0]]
  $region81: #{model_forward.3} parent=0
    _
  %s15 = ssub.s32 1, %s13
  %s16 = scalar_select 0, %s15, %s13
  loop: start=0, step=1, limit=4
  $region2: #{model_forward.3} parent=0 // loop_pre_header
    _
  $region3: #{model_forward.3} parent=0 // loop_header
    %s18 = sphi 0, %s22
    %p19 = scmp.ge.s32.totalorder %s18, 4
    %s25 = sphi 0, %s37
    %s26 = sphi 0, %s33
    %s27 = sphi 0, %s25
    %s28 = sphi 0, %s26
    %s29 = sphi 0, %s27
    %s30 = sphi 0, %s28
    %s42 = sphi 0, %s44
    %s45 = sphi 0, %s42
    %s46 = sphi 0, %s45
    %s62 = sphi 0, %s46
    %s70 = sphi 0, %s72
    %s73 = sphi 0, %s70
    %s74 = sphi 0, %s73
    %s90 = sphi 0, %s74
    %s98 = sphi 0, %s100
    %s101 = sphi 0, %s98
    %s102 = sphi 0, %s101
    %s118 = sphi 0, %s102
    %s122 = sphi 0, %s122
    %s124 = sphi 0, %s122
    %s125 = sphi 0, %s124
    %s139 = sphi 0, %s125
    %s143 = sphi 0, %s143
    %s145 = sphi 0, %s143
    %s146 = sphi 0, %s145
    %s160 = sphi 0, %s146
    %s164 = sphi 0, %s164
    %s166 = sphi 0, %s164
    %s167 = sphi 0, %s166
    %s181 = sphi 0, %s167
    %s185 = sphi 0, %s185
    %s187 = sphi 0, %s185
    %s188 = sphi 0, %s187
    %s202 = sphi 0, %s188
    %s206 = sphi 0, %s206
    %s208 = sphi 0, %s206
    %s209 = sphi 0, %s208
    %s223 = sphi 0, %s209
    %s227 = sphi 0, %s227
    %s229 = sphi 0, %s227
    %s230 = sphi 0, %s229
    %s244 = sphi 0, %s230
    %s248 = sphi 0, %s248
    %s250 = sphi 0, %s248
    %s251 = sphi 0, %s250
    %s265 = sphi 0, %s251
    %s269 = sphi 0, %s269
    %s271 = sphi 0, %s269
    %s272 = sphi 0, %s271
    %s286 = sphi 0, %s272
    %s290 = sphi 0, %s290
    %s292 = sphi 0, %s290
    %s293 = sphi 0, %s292
    %s307 = sphi 0, %s293
    %s315 = sphi 0, %s317
    %s318 = sphi 0, %s315
    %s319 = sphi 0, %s318
    %s335 = sphi 0, %s319
  $region4: #{model_forward.3} parent=0 // loop_header_branch
    %21 = sbr.rel (%p19) target = $region8
  $region5: #{model_forward.3} parent=0 // loop_body
    %s23 = ssub.s32 %s18, 1
    %s24 = ssub.s32 %s18, 2
    %s31 = sadd.s32 1, %s26
    %p32 = scmp.ge.s32.totalorder %s31, 1
    %s33 = scalar_select %p32, 0, %s31
    %s34 = sadd.s32 1, %s25
    %s35 = scalar_select %p32, %s34, %s25
    %p36 = scmp.ge.s32.totalorder %s35, 2
    %s37 = scalar_select %p36, 0, %s35
    %s38 = ssub.s32 %s25, %s37
    %s39 = ssub.s32 %s26, %s33
    %s40 = sor.u32 %s38, %s39
    %p41 = scmp.eq.s32.totalorder %s40, 0
    %s43 = sadd.s32 %s42, 1
    %s44 = scalar_select %p41, %s42, %s43
    %p47 = pneg %p41
    %p48 = scmp.eq.s32.totalorder %s18, 1
    %p49 = por %p47, %p48
    %p50 = scmp.ne.s32.totalorder %s42, %s45
    %p51 = scmp.eq.s32.totalorder %s18, 0
    %p52 = por %p50, %p51
    %p53 = scmp.ne.s32.totalorder %s42, %s45
    %p54 = scmp.eq.s32.totalorder %s23, 1
    %p55 = por %p53, %p54
    %p56 = scmp.ne.s32.totalorder %s45, %s46
    %p57 = scmp.eq.s32.totalorder %s23, 0
    %p58 = por %p56, %p57
    %p59 = scmp.ne.s32.totalorder %s45, %s46
    %p60 = scmp.eq.s32.totalorder %s24, 1
    %p61 = por %p59, %p60
    %p63 = scmp.ne.s32.totalorder %s46, %s62
    %p64 = scmp.eq.s32.totalorder %s24, 0
    %p65 = por %p63, %p64
    %s66 = ssub.s32 %s25, %s37
    %s67 = ssub.s32 %s26, %s33
    %s68 = sor.u32 %s66, %s67
    %p69 = scmp.eq.s32.totalorder %s68, 0
    %s71 = sadd.s32 %s70, 1
    %s72 = scalar_select %p69, %s70, %s71
    %p75 = pneg %p69
    %p76 = scmp.eq.s32.totalorder %s18, 1
    %p77 = por %p75, %p76
    %p78 = scmp.ne.s32.totalorder %s70, %s73
    %p79 = scmp.eq.s32.totalorder %s18, 0
    %p80 = por %p78, %p79
    %p81 = scmp.ne.s32.totalorder %s70, %s73
    %p82 = scmp.eq.s32.totalorder %s23, 1
    %p83 = por %p81, %p82
    %p84 = scmp.ne.s32.totalorder %s73, %s74
    %p85 = scmp.eq.s32.totalorder %s23, 0
    %p86 = por %p84, %p85
    %p87 = scmp.ne.s32.totalorder %s73, %s74
    %p88 = scmp.eq.s32.totalorder %s24, 1
    %p89 = por %p87, %p88
    %p91 = scmp.ne.s32.totalorder %s74, %s90
    %p92 = scmp.eq.s32.totalorder %s24, 0
    %p93 = por %p91, %p92
    %s94 = ssub.s32 %s25, %s37
    %s95 = ssub.s32 %s26, %s33
    %s96 = sor.u32 %s94, %s95
    %p97 = scmp.eq.s32.totalorder %s96, 0
    %s99 = sadd.s32 %s98, 1
    %s100 = scalar_select %p97, %s98, %s99
    %p103 = pneg %p97
    %p104 = scmp.eq.s32.totalorder %s18, 1
    %p105 = por %p103, %p104
    %p106 = scmp.ne.s32.totalorder %s98, %s101
    %p107 = scmp.eq.s32.totalorder %s18, 0
    %p108 = por %p106, %p107
    %p109 = scmp.ne.s32.totalorder %s98, %s101
    %p110 = scmp.eq.s32.totalorder %s23, 1
    %p111 = por %p109, %p110
    %p112 = scmp.ne.s32.totalorder %s101, %s102
    %p113 = scmp.eq.s32.totalorder %s23, 0
    %p114 = por %p112, %p113
    %p115 = scmp.ne.s32.totalorder %s101, %s102
    %p116 = scmp.eq.s32.totalorder %s24, 1
    %p117 = por %p115, %p116
    %p119 = scmp.ne.s32.totalorder %s102, %s118
    %p120 = scmp.eq.s32.totalorder %s24, 0
    %p121 = por %p119, %p120
    %s123 = sadd.s32 %s122, 1
    %p126 = scmp.eq.s32.totalorder %s18, 1
    %p127 = scmp.ne.s32.totalorder %s122, %s124
    %p128 = scmp.eq.s32.totalorder %s18, 0
    %p129 = por %p127, %p128
    %p130 = scmp.ne.s32.totalorder %s122, %s124
    %p131 = scmp.eq.s32.totalorder %s23, 1
    %p132 = por %p130, %p131
    %p133 = scmp.ne.s32.totalorder %s124, %s125
    %p134 = scmp.eq.s32.totalorder %s23, 0
    %p135 = por %p133, %p134
    %p136 = scmp.ne.s32.totalorder %s124, %s125
    %p137 = scmp.eq.s32.totalorder %s24, 1
    %p138 = por %p136, %p137
    %p140 = scmp.ne.s32.totalorder %s125, %s139
    %p141 = scmp.eq.s32.totalorder %s24, 0
    %p142 = por %p140, %p141
    %s144 = sadd.s32 %s143, 1
    %p147 = scmp.eq.s32.totalorder %s18, 1
    %p148 = scmp.ne.s32.totalorder %s143, %s145
    %p149 = scmp.eq.s32.totalorder %s18, 0
    %p150 = por %p148, %p149
    %p151 = scmp.ne.s32.totalorder %s143, %s145
    %p152 = scmp.eq.s32.totalorder %s23, 1
    %p153 = por %p151, %p152
    %p154 = scmp.ne.s32.totalorder %s145, %s146
    %p155 = scmp.eq.s32.totalorder %s23, 0
    %p156 = por %p154, %p155
    %p157 = scmp.ne.s32.totalorder %s145, %s146
    %p158 = scmp.eq.s32.totalorder %s24, 1
    %p159 = por %p157, %p158
    %p161 = scmp.ne.s32.totalorder %s146, %s160
    %p162 = scmp.eq.s32.totalorder %s24, 0
    %p163 = por %p161, %p162
    %s165 = sadd.s32 %s164, 1
    %p168 = scmp.eq.s32.totalorder %s18, 1
    %p169 = scmp.ne.s32.totalorder %s164, %s166
    %p170 = scmp.eq.s32.totalorder %s18, 0
    %p171 = por %p169, %p170
    %p172 = scmp.ne.s32.totalorder %s164, %s166
    %p173 = scmp.eq.s32.totalorder %s23, 1
    %p174 = por %p172, %p173
    %p175 = scmp.ne.s32.totalorder %s166, %s167
    %p176 = scmp.eq.s32.totalorder %s23, 0
    %p177 = por %p175, %p176
    %p178 = scmp.ne.s32.totalorder %s166, %s167
    %p179 = scmp.eq.s32.totalorder %s24, 1
    %p180 = por %p178, %p179
    %p182 = scmp.ne.s32.totalorder %s167, %s181
    %p183 = scmp.eq.s32.totalorder %s24, 0
    %p184 = por %p182, %p183
    %s186 = sadd.s32 %s185, 1
    %p189 = scmp.eq.s32.totalorder %s18, 1
    %p190 = scmp.ne.s32.totalorder %s185, %s187
    %p191 = scmp.eq.s32.totalorder %s18, 0
    %p192 = por %p190, %p191
    %p193 = scmp.ne.s32.totalorder %s185, %s187
    %p194 = scmp.eq.s32.totalorder %s23, 1
    %p195 = por %p193, %p194
    %p196 = scmp.ne.s32.totalorder %s187, %s188
    %p197 = scmp.eq.s32.totalorder %s23, 0
    %p198 = por %p196, %p197
    %p199 = scmp.ne.s32.totalorder %s187, %s188
    %p200 = scmp.eq.s32.totalorder %s24, 1
    %p201 = por %p199, %p200
    %p203 = scmp.ne.s32.totalorder %s188, %s202
    %p204 = scmp.eq.s32.totalorder %s24, 0
    %p205 = por %p203, %p204
    %s207 = sadd.s32 %s206, 1
    %p210 = scmp.eq.s32.totalorder %s18, 1
    %p211 = scmp.ne.s32.totalorder %s206, %s208
    %p212 = scmp.eq.s32.totalorder %s18, 0
    %p213 = por %p211, %p212
    %p214 = scmp.ne.s32.totalorder %s206, %s208
    %p215 = scmp.eq.s32.totalorder %s23, 1
    %p216 = por %p214, %p215
    %p217 = scmp.ne.s32.totalorder %s208, %s209
    %p218 = scmp.eq.s32.totalorder %s23, 0
    %p219 = por %p217, %p218
    %p220 = scmp.ne.s32.totalorder %s208, %s209
    %p221 = scmp.eq.s32.totalorder %s24, 1
    %p222 = por %p220, %p221
    %p224 = scmp.ne.s32.totalorder %s209, %s223
    %p225 = scmp.eq.s32.totalorder %s24, 0
    %p226 = por %p224, %p225
    %s228 = sadd.s32 %s227, 1
    %p231 = scmp.eq.s32.totalorder %s18, 1
    %p232 = scmp.ne.s32.totalorder %s227, %s229
    %p233 = scmp.eq.s32.totalorder %s18, 0
    %p234 = por %p232, %p233
    %p235 = scmp.ne.s32.totalorder %s227, %s229
    %p236 = scmp.eq.s32.totalorder %s23, 1
    %p237 = por %p235, %p236
    %p238 = scmp.ne.s32.totalorder %s229, %s230
    %p239 = scmp.eq.s32.totalorder %s23, 0
    %p240 = por %p238, %p239
    %p241 = scmp.ne.s32.totalorder %s229, %s230
    %p242 = scmp.eq.s32.totalorder %s24, 1
    %p243 = por %p241, %p242
    %p245 = scmp.ne.s32.totalorder %s230, %s244
    %p246 = scmp.eq.s32.totalorder %s24, 0
    %p247 = por %p245, %p246
    %s249 = sadd.s32 %s248, 1
    %p252 = scmp.eq.s32.totalorder %s18, 1
    %p253 = scmp.ne.s32.totalorder %s248, %s250
    %p254 = scmp.eq.s32.totalorder %s18, 0
    %p255 = por %p253, %p254
    %p256 = scmp.ne.s32.totalorder %s248, %s250
    %p257 = scmp.eq.s32.totalorder %s23, 1
    %p258 = por %p256, %p257
    %p259 = scmp.ne.s32.totalorder %s250, %s251
    %p260 = scmp.eq.s32.totalorder %s23, 0
    %p261 = por %p259, %p260
    %p262 = scmp.ne.s32.totalorder %s250, %s251
    %p263 = scmp.eq.s32.totalorder %s24, 1
    %p264 = por %p262, %p263
    %p266 = scmp.ne.s32.totalorder %s251, %s265
    %p267 = scmp.eq.s32.totalorder %s24, 0
    %p268 = por %p266, %p267
    %s270 = sadd.s32 %s269, 1
    %p273 = scmp.eq.s32.totalorder %s18, 1
    %p274 = scmp.ne.s32.totalorder %s269, %s271
    %p275 = scmp.eq.s32.totalorder %s18, 0
    %p276 = por %p274, %p275
    %p277 = scmp.ne.s32.totalorder %s269, %s271
    %p278 = scmp.eq.s32.totalorder %s23, 1
    %p279 = por %p277, %p278
    %p280 = scmp.ne.s32.totalorder %s271, %s272
    %p281 = scmp.eq.s32.totalorder %s23, 0
    %p282 = por %p280, %p281
    %p283 = scmp.ne.s32.totalorder %s271, %s272
    %p284 = scmp.eq.s32.totalorder %s24, 1
    %p285 = por %p283, %p284
    %p287 = scmp.ne.s32.totalorder %s272, %s286
    %p288 = scmp.eq.s32.totalorder %s24, 0
    %p289 = por %p287, %p288
    %s291 = sadd.s32 %s290, 1
    %p294 = scmp.eq.s32.totalorder %s18, 1
    %p295 = scmp.ne.s32.totalorder %s290, %s292
    %p296 = scmp.eq.s32.totalorder %s18, 0
    %p297 = por %p295, %p296
    %p298 = scmp.ne.s32.totalorder %s290, %s292
    %p299 = scmp.eq.s32.totalorder %s23, 1
    %p300 = por %p298, %p299
    %p301 = scmp.ne.s32.totalorder %s292, %s293
    %p302 = scmp.eq.s32.totalorder %s23, 0
    %p303 = por %p301, %p302
    %p304 = scmp.ne.s32.totalorder %s292, %s293
    %p305 = scmp.eq.s32.totalorder %s24, 1
    %p306 = por %p304, %p305
    %p308 = scmp.ne.s32.totalorder %s293, %s307
    %p309 = scmp.eq.s32.totalorder %s24, 0
    %p310 = por %p308, %p309
    %s311 = ssub.s32 %s25, %s37
    %s312 = ssub.s32 %s26, %s33
    %s313 = sor.u32 %s311, %s312
    %p314 = scmp.eq.s32.totalorder %s313, 0
    %s316 = sadd.s32 %s315, 1
    %s317 = scalar_select %p314, %s315, %s316
    %p320 = pneg %p314
    %p321 = scmp.eq.s32.totalorder %s18, 1
    %p322 = por %p320, %p321
    %p323 = scmp.ne.s32.totalorder %s315, %s318
    %p324 = scmp.eq.s32.totalorder %s18, 0
    %p325 = por %p323, %p324
    %p326 = scmp.ne.s32.totalorder %s315, %s318
    %p327 = scmp.eq.s32.totalorder %s23, 1
    %p328 = por %p326, %p327
    %p329 = scmp.ne.s32.totalorder %s318, %s319
    %p330 = scmp.eq.s32.totalorder %s23, 0
    %p331 = por %p329, %p330
    %p332 = scmp.ne.s32.totalorder %s318, %s319
    %p333 = scmp.eq.s32.totalorder %s24, 1
    %p334 = por %p332, %p333
    %p336 = scmp.ne.s32.totalorder %s319, %s335
    %p337 = scmp.eq.s32.totalorder %s24, 0
    %p338 = por %p336, %p337
    %p339 = scmp.le.s32.totalorder 1, %s18
    %p340 = scmp.lt.s32.totalorder %s18, 3
    %p341 = pnand %p339, %p340
    %p342 = pneg %p341
    // Predicated region
    $region9: #{model_forward.3} parent=5 // pred_check
      _
    $region10: #{model_forward.3} parent=5 // pred_check_branch
      %344 = sbr.rel (%p341) target = $region12
    $region11: #{model_forward.3} parent=5 // pred_region
      %s345 = ssub.s32 %s18, 1
      // Predicated region
      $region13: #{model_forward.3} parent=11 // pred_check
        %p346 = pneg %p135
      $region14: #{model_forward.3} parent=11 // pred_check_branch
        %348 = sbr.rel (%p346) target = $region16
      $region15: #{model_forward.3} parent=11 // pred_region
        _
      $region16: #{model_forward.3} parent=11 // pred_fallthru
        _
      // Predicated region
      $region17: #{model_forward.3} parent=11 // pred_check
        %p349 = pneg %p156
      $region18: #{model_forward.3} parent=11 // pred_check_branch
        %351 = sbr.rel (%p349) target = $region20
      $region19: #{model_forward.3} parent=11 // pred_region
        _
      $region20: #{model_forward.3} parent=11 // pred_fallthru
        _
      // Predicated region
      $region21: #{model_forward.3} parent=11 // pred_check
        %p352 = pneg %p177
      $region22: #{model_forward.3} parent=11 // pred_check_branch
        %354 = sbr.rel (%p352) target = $region24
      $region23: #{model_forward.3} parent=11 // pred_region
        _
      $region24: #{model_forward.3} parent=11 // pred_fallthru
        _
      // Predicated region
      $region25: #{model_forward.3} parent=11 // pred_check
        %p355 = pneg %p198
      $region26: #{model_forward.3} parent=11 // pred_check_branch
        %357 = sbr.rel (%p355) target = $region28
      $region27: #{model_forward.3} parent=11 // pred_region
        _
      $region28: #{model_forward.3} parent=11 // pred_fallthru
        _
      // Predicated region
      $region29: #{model_forward.3} parent=11 // pred_check
        %p358 = pneg %p219
      $region30: #{model_forward.3} parent=11 // pred_check_branch
        %360 = sbr.rel (%p358) target = $region32
      $region31: #{model_forward.3} parent=11 // pred_region
        _
      $region32: #{model_forward.3} parent=11 // pred_fallthru
        _
      // Predicated region
      $region33: #{model_forward.3} parent=11 // pred_check
        %p361 = pneg %p240
      $region34: #{model_forward.3} parent=11 // pred_check_branch
        %363 = sbr.rel (%p361) target = $region36
      $region35: #{model_forward.3} parent=11 // pred_region
        _
      $region36: #{model_forward.3} parent=11 // pred_fallthru
        _
      // Predicated region
      $region37: #{model_forward.3} parent=11 // pred_check
        %p364 = pneg %p261
      $region38: #{model_forward.3} parent=11 // pred_check_branch
        %366 = sbr.rel (%p364) target = $region40
      $region39: #{model_forward.3} parent=11 // pred_region
        _
      $region40: #{model_forward.3} parent=11 // pred_fallthru
        _
      // Predicated region
      $region41: #{model_forward.3} parent=11 // pred_check
        %p367 = pneg %p282
      $region42: #{model_forward.3} parent=11 // pred_check_branch
        %369 = sbr.rel (%p367) target = $region44
      $region43: #{model_forward.3} parent=11 // pred_region
        _
      $region44: #{model_forward.3} parent=11 // pred_fallthru
        _
      // Predicated region
      $region45: #{model_forward.3} parent=11 // pred_check
        %p370 = pneg %p303
      $region46: #{model_forward.3} parent=11 // pred_check_branch
        %372 = sbr.rel (%p370) target = $region48
      $region47: #{model_forward.3} parent=11 // pred_region
        _
      $region48: #{model_forward.3} parent=11 // pred_fallthru
        _
    $region12: #{model_forward.3} parent=5 // pred_fallthru
      _
    %p373 = scmp.lt.s32.totalorder %s18, 2
    // Predicated region
    $region49: #{model_forward.3} parent=5 // pred_check
      %p374 = pneg %p373
    $region50: #{model_forward.3} parent=5 // pred_check_branch
      %376 = sbr.rel (%p374) target = $region52
    $region51: #{model_forward.3} parent=5 // pred_region
      // Predicated region
      $region53: #{model_forward.3} parent=51 // pred_check
        %p377 = pneg %p52
      $region54: #{model_forward.3} parent=51 // pred_check_branch
        %379 = sbr.rel (%p377) target = $region56
      $region55: #{model_forward.3} parent=51 // pred_region
        %s380 = smul.u32 2, %s26
        %p381 = scmp.lt.s32.totalorder %s25, 1
        %s382 = scalar_select %p381, %s25, 1
        %p383 = scmp.lt.s32.totalorder %s380, 1
        %s384 = scalar_select %p383, %s380, 1
        %s385 = smul.addr %s382, 2
        %s386 = sadd.s32 %s384, %s385
        %s387 = smul.addr %s386, 4
        %s388 = scalar_lea.vmem %s0, %s387
        %s389 = smul.u32 2, %s26
      $region56: #{model_forward.3} parent=51 // pred_fallthru
        _
      // Predicated region
      $region57: #{model_forward.3} parent=51 // pred_check
        %p390 = pneg %p80
      $region58: #{model_forward.3} parent=51 // pred_check_branch
        %392 = sbr.rel (%p390) target = $region60
      $region59: #{model_forward.3} parent=51 // pred_region
        %s393 = smul.u32 2, %s26
        %p394 = scmp.lt.s32.totalorder %s25, 1
        %s395 = scalar_select %p394, %s25, 1
        %p396 = scmp.lt.s32.totalorder %s393, 1
        %s397 = scalar_select %p396, %s393, 1
        %s398 = smul.addr %s395, 2
        %s399 = sadd.s32 %s397, %s398
        %s400 = smul.addr %s399, 4
        %s401 = scalar_lea.vmem %s1, %s400
        %s402 = smul.u32 2, %s26
      $region60: #{model_forward.3} parent=51 // pred_fallthru
        _
      // Predicated region
      $region61: #{model_forward.3} parent=51 // pred_check
        %p403 = pneg %p108
      $region62: #{model_forward.3} parent=51 // pred_check_branch
        %405 = sbr.rel (%p403) target = $region64
      $region63: #{model_forward.3} parent=51 // pred_region
        %s406 = smul.u32 2, %s26
        %p407 = scmp.lt.s32.totalorder %s25, 1
        %s408 = scalar_select %p407, %s25, 1
        %p409 = scmp.lt.s32.totalorder %s406, 1
        %s410 = scalar_select %p409, %s406, 1
        %s411 = smul.addr %s408, 2
        %s412 = sadd.s32 %s410, %s411
        %s413 = smul.addr %s412, 4
        %s414 = scalar_lea.vmem %s2, %s413
        %s415 = smul.u32 2, %s26
      $region64: #{model_forward.3} parent=51 // pred_fallthru
        _
    $region52: #{model_forward.3} parent=5 // pred_fallthru
      _
    %p416 = scmp.le.s32.totalorder 1, %s18
    %p417 = scmp.lt.s32.totalorder %s18, 3
    %p418 = pnand %p416, %p417
    %p419 = pneg %p418
    // Predicated region
    $region65: #{model_forward.3} parent=5 // pred_check
      _
    $region66: #{model_forward.3} parent=5 // pred_check_branch
      %421 = sbr.rel (%p418) target = $region68
    $region67: #{model_forward.3} parent=5 // pred_region
      %s422 = ssub.s32 %s18, 1
      %s423 = smul.u32 2, %s28
      %p424 = scmp.lt.s32.totalorder %s27, 1
      %s425 = scalar_select %p424, %s27, 1
      %p426 = scmp.lt.s32.totalorder %s423, 1
      %s427 = scalar_select %p426, %s423, 1
      %s428 = smul.addr %s425, 2
      %s429 = sadd.s32 %s427, %s428
      %s430 = smul.addr %s429, 4
      %s431 = scalar_lea.vmem %s0, %s430
      %p432 = pneg %p58
      %p433 = pneg %p55
      %s434 = smul.u32 2, %s28
      %p435 = scmp.lt.s32.totalorder %s27, 1
      %s436 = scalar_select %p435, %s27, 1
      %p437 = scmp.lt.s32.totalorder %s434, 1
      %s438 = scalar_select %p437, %s434, 1
      %s439 = smul.addr %s436, 2
      %s440 = sadd.s32 %s438, %s439
      %s441 = smul.addr %s440, 4
      %s442 = scalar_lea.vmem %s1, %s441
      %p443 = pneg %p86
      %p444 = pneg %p83
      %s445 = smul.u32 2, %s28
      %p446 = scmp.lt.s32.totalorder %s27, 1
      %s447 = scalar_select %p446, %s27, 1
      %p448 = scmp.lt.s32.totalorder %s445, 1
      %s449 = scalar_select %p448, %s445, 1
      %s450 = smul.addr %s447, 2
      %s451 = sadd.s32 %s449, %s450
      %s452 = smul.addr %s451, 4
      %s453 = scalar_lea.vmem %s2, %s452
      %p454 = pneg %p114
      %p455 = pneg %p111
      %p456 = pneg %p135
      %p457 = pneg %p132
      %p458 = pneg %p156
      %p459 = pneg %p153
      %p460 = pneg %p177
      %p461 = pneg %p174
      %p462 = pneg %p198
      %p463 = pneg %p195
      %p464 = pneg %p219
      %p465 = pneg %p216
      %p466 = pneg %p240
      %p467 = pneg %p237
      %p468 = pneg %p261
      %p469 = pneg %p258
      %p470 = pneg %p282
      %p471 = pneg %p279
      %p472 = pneg %p303
      %p473 = pneg %p300
      %p474 = pneg %p331
      %p475 = pneg %p328
      %s476 = smul.u32 2, %s28
      %p477 = scmp.lt.s32.totalorder %s27, 1
      %s478 = scalar_select %p477, %s27, 1
      %p479 = scmp.lt.s32.totalorder %s476, 1
      %s480 = scalar_select %p479, %s476, 1
      %s481 = smul.addr %s478, 2
      %s482 = sadd.s32 %s480, %s481
      %s483 = smul.addr %s482, 8
      %s484 = scalar_lea.vmem %s12, %s483
      %s485 = smul.u32 2, %s28
      %p486 = scmp.lt.s32.totalorder %s27, 1
      %s487 = scalar_select %p486, %s27, 1
      %p488 = scmp.lt.s32.totalorder %s485, 1
      %s489 = scalar_select %p488, %s485, 1
      %s490 = smul.addr %s487, 2
      %s491 = sadd.s32 %s489, %s490
      %s492 = smul.addr %s491, 4
      %s493 = scalar_lea.vmem %s0, %s492
      %s494 = smul.u32 2, %s28
      %s495 = smul.u32 2, %s28
      %p496 = scmp.lt.s32.totalorder %s27, 1
      %s497 = scalar_select %p496, %s27, 1
      %p498 = scmp.lt.s32.totalorder %s495, 1
      %s499 = scalar_select %p498, %s495, 1
      %s500 = smul.addr %s497, 2
      %s501 = sadd.s32 %s499, %s500
      %s502 = smul.addr %s501, 4
      %s503 = scalar_lea.vmem %s1, %s502
      %s504 = smul.u32 2, %s28
      %s505 = smul.u32 2, %s28
      %p506 = scmp.lt.s32.totalorder %s27, 1
      %s507 = scalar_select %p506, %s27, 1
      %p508 = scmp.lt.s32.totalorder %s505, 1
      %s509 = scalar_select %p508, %s505, 1
      %s510 = smul.addr %s507, 2
      %s511 = sadd.s32 %s509, %s510
      %s512 = smul.addr %s511, 4
      %s513 = scalar_lea.vmem %s2, %s512
      %s514 = smul.u32 2, %s28
      %s515 = smul.u32 2, %s28
      %p516 = scmp.lt.s32.totalorder %s27, 1
      %s517 = scalar_select %p516, %s27, 1
      %p518 = scmp.lt.s32.totalorder %s515, 1
      %s519 = scalar_select %p518, %s515, 1
      %s520 = smul.addr %s517, 2
      %s521 = sadd.s32 %s519, %s520
      %s522 = smul.addr %s521, 8
      %s523 = scalar_lea.vmem %s12, %s522
      %s524 = smul.u32 2, %s28
      %v525 = vld [vmem:[%s4] sm:$0xff]
      %v526 = vld [vmem:[%s503] sm:$0x77]
      %528 = vst [vmem:[#allocation1] ss:$2 sm:$0xff] %v526
      %v529 = vld.sshfl [vmem:[#allocation1] sm:$0xff pattern:$0x75316420]
      %v530 = vld.sshfl [vmem:[#allocation1 + $0x8] sm:$0xff pattern:$0x75316420]
      %vm531 = vcmask 23552
      %v533 = vsel %vm531, %v525, 0
      %vm535 = vcmask 1042432
      %v536 = vsel %vm535, %v529, 0
      %v538 = vsel %vm535, %v530, 0
      %540 = vmatpush.msra.mxu0 0.0
      %541 = vmatpush.msra.mxu0 0.0
      %542 = vmatpush.msra.mxu0 0.0
      %543 = vmatpush.msra.mxu0 0.0
      %544 = vmatpush.msra.mxu0 0.0
      %545 = vmatpush.msra.mxu0 0.0
      %546 = vmatpush.msra.mxu0 0.0
      %547 = vmatpush.msra.mxu0 0.0
      %548 = vmatpush.msra.mxu0 0.0
      %549 = vmatpush.msra.mxu0 0.0
      %550 = vmatpush.msra.mxu0 0.0
      %551 = vmatpush.msra.mxu0 0.0
      %552 = vmatpush.msra.mxu0 0.0
      %553 = vmatpush.msra.mxu0 0.0
      %554 = vmatpush.msra.mxu0 0.0
      %555 = vmatpush.msra.mxu0 %v536
      %556 = vmatmul.f32.gmra.mxu0 %v533
      %v557 = vpop.f32.mrf.mxu0
      %v558 = vadd.f32 0.0, %v557
      %559 = vdwg.mxu0
      %560 = vmatpush.msra.mxu0 0.0
      %561 = vmatpush.msra.mxu0 0.0
      %562 = vmatpush.msra.mxu0 0.0
      %563 = vmatpush.msra.mxu0 0.0
      %564 = vmatpush.msra.mxu0 0.0
      %565 = vmatpush.msra.mxu0 0.0
      %566 = vmatpush.msra.mxu0 0.0
      %567 = vmatpush.msra.mxu0 0.0
      %568 = vmatpush.msra.mxu0 0.0
      %569 = vmatpush.msra.mxu0 0.0
      %570 = vmatpush.msra.mxu0 0.0
      %571 = vmatpush.msra.mxu0 0.0
      %572 = vmatpush.msra.mxu0 0.0
      %573 = vmatpush.msra.mxu0 0.0
      %574 = vmatpush.msra.mxu0 0.0
      %575 = vmatpush.msra.mxu0 %v538
      %576 = vmatmul.f32.gmra.mxu0 %v533
      %v577 = vpop.f32.mrf.mxu0
      %v578 = vadd.f32 0.0, %v577
      %579 = vdwg.mxu0
      %v580 = vld [vmem:[%s3] sm:$0xff]
      %v581 = vld [vmem:[%s493] sm:$0x77]
      %583 = vst [vmem:[#allocation1] ss:$2 sm:$0xff] %v581
      %v584 = vld.sshfl [vmem:[#allocation1] sm:$0xff pattern:$0x75316420]
      %v585 = vld.sshfl [vmem:[#allocation1 + $0x8] sm:$0xff pattern:$0x75316420]
      %v587 = vsel %vm531, %v580, 0
      %v589 = vsel %vm535, %v584, 0
      %v591 = vsel %vm535, %v585, 0
      %593 = vmatpush.msra.mxu0 0.0
      %594 = vmatpush.msra.mxu0 0.0
      %595 = vmatpush.msra.mxu0 0.0
      %596 = vmatpush.msra.mxu0 0.0
      %597 = vmatpush.msra.mxu0 0.0
      %598 = vmatpush.msra.mxu0 0.0
      %599 = vmatpush.msra.mxu0 0.0
      %600 = vmatpush.msra.mxu0 0.0
      %601 = vmatpush.msra.mxu0 0.0
      %602 = vmatpush.msra.mxu0 0.0
      %603 = vmatpush.msra.mxu0 0.0
      %604 = vmatpush.msra.mxu0 0.0
      %605 = vmatpush.msra.mxu0 0.0
      %606 = vmatpush.msra.mxu0 0.0
      %607 = vmatpush.msra.mxu0 0.0
      %608 = vmatpush.msra.mxu0 %v589
      %609 = vmatmul.f32.gmra.mxu0 %v587
      %v610 = vpop.f32.mrf.mxu0
      %v611 = vadd.f32 %v558, %v610
      %612 = vdwg.mxu0
      %613 = vmatpush.msra.mxu0 0.0
      %614 = vmatpush.msra.mxu0 0.0
      %615 = vmatpush.msra.mxu0 0.0
      %616 = vmatpush.msra.mxu0 0.0
      %617 = vmatpush.msra.mxu0 0.0
      %618 = vmatpush.msra.mxu0 0.0
      %619 = vmatpush.msra.mxu0 0.0
      %620 = vmatpush.msra.mxu0 0.0
      %621 = vmatpush.msra.mxu0 0.0
      %622 = vmatpush.msra.mxu0 0.0
      %623 = vmatpush.msra.mxu0 0.0
      %624 = vmatpush.msra.mxu0 0.0
      %625 = vmatpush.msra.mxu0 0.0
      %626 = vmatpush.msra.mxu0 0.0
      %627 = vmatpush.msra.mxu0 0.0
      %628 = vmatpush.msra.mxu0 %v591
      %629 = vmatmul.f32.gmra.mxu0 %v587
      %v630 = vpop.f32.mrf.mxu0
      %v631 = vadd.f32 %v578, %v630
      %632 = vdwg.mxu0
      %v633 = vld [vmem:[%s5] sm:$0xff]
      %v634 = vld [vmem:[%s513] sm:$0x77]
      %636 = vst [vmem:[#allocation1] ss:$2 sm:$0xff] %v634
      %v637 = vld.sshfl [vmem:[#allocation1] sm:$0xff pattern:$0x75316420]
      %v638 = vld.sshfl [vmem:[#allocation1 + $0x8] sm:$0xff pattern:$0x75316420]
      %v640 = vsel %vm531, %v633, 0
      %v642 = vsel %vm535, %v637, 0
      %v644 = vsel %vm535, %v638, 0
      %646 = vmatpush.msra.mxu0 0.0
      %647 = vmatpush.msra.mxu0 0.0
      %648 = vmatpush.msra.mxu0 0.0
      %649 = vmatpush.msra.mxu0 0.0
      %650 = vmatpush.msra.mxu0 0.0
      %651 = vmatpush.msra.mxu0 0.0
      %652 = vmatpush.msra.mxu0 0.0
      %653 = vmatpush.msra.mxu0 0.0
      %654 = vmatpush.msra.mxu0 0.0
      %655 = vmatpush.msra.mxu0 0.0
      %656 = vmatpush.msra.mxu0 0.0
      %657 = vmatpush.msra.mxu0 0.0
      %658 = vmatpush.msra.mxu0 0.0
      %659 = vmatpush.msra.mxu0 0.0
      %660 = vmatpush.msra.mxu0 0.0
      %661 = vmatpush.msra.mxu0 %v642
      %662 = vmatmul.f32.gmra.mxu0 %v640
      %v663 = vpop.f32.mrf.mxu0
      %v664 = vadd.f32 %v558, %v663
      %665 = vdwg.mxu0
      %666 = vmatpush.msra.mxu0 0.0
      %667 = vmatpush.msra.mxu0 0.0
      %668 = vmatpush.msra.mxu0 0.0
      %669 = vmatpush.msra.mxu0 0.0
      %670 = vmatpush.msra.mxu0 0.0
      %671 = vmatpush.msra.mxu0 0.0
      %672 = vmatpush.msra.mxu0 0.0
      %673 = vmatpush.msra.mxu0 0.0
      %674 = vmatpush.msra.mxu0 0.0
      %675 = vmatpush.msra.mxu0 0.0
      %676 = vmatpush.msra.mxu0 0.0
      %677 = vmatpush.msra.mxu0 0.0
      %678 = vmatpush.msra.mxu0 0.0
      %679 = vmatpush.msra.mxu0 0.0
      %680 = vmatpush.msra.mxu0 0.0
      %681 = vmatpush.msra.mxu0 %v644
      %682 = vmatmul.f32.gmra.mxu0 %v640
      %v683 = vpop.f32.mrf.mxu0
      %v684 = vadd.f32 %v578, %v683
      %685 = vdwg.mxu0
      %v686 = vld [vmem:[%s6] sm:$0xff]
      %688 = vset.pattern.permute.xlu0 0
      %689 = vperm.xlu0 %688, %v686
      %v690 = vpop.permute.xlu0 %689
      %v692 = vmul.f32 %v611, %v690
      %v693 = vmul.f32 %v631, %v690
      %v694 = vld [vmem:[%s7] sm:$0xff]
      %696 = vset.pattern.permute.xlu0 0
      %697 = vperm.xlu0 %696, %v694
      %v698 = vpop.permute.xlu0 %697
      %v700 = vadd.f32 %v692, %v698
      %v701 = vadd.f32 %v693, %v698
      %v702 = vld [vmem:[%s8] sm:$0xff]
      %704 = vset.pattern.permute.xlu0 0
      %705 = vperm.xlu0 %704, %v702
      %v706 = vpop.permute.xlu0 %705
      %v708 = vmul.f32 %v664, %v706
      %v709 = vmul.f32 %v684, %v706
      %v710 = vld [vmem:[%s9] sm:$0xff]
      %712 = vset.pattern.permute.xlu0 0
      %713 = vperm.xlu0 %712, %v710
      %v714 = vpop.permute.xlu0 %713
      %v716 = vadd.f32 %v708, %v714
      %v717 = vadd.f32 %v709, %v714
      %v718 = vmul.f32 %v700, 0.5
      %v719 = vmul.f32 %v701, 0.5
      %v720 = vtanh.pop %v718
      %v721 = vtanh.pop %v719
      %v722 = vmul.f32 %v720, 0.5
      %v723 = vmul.f32 %v721, 0.5
      %v724 = vadd.f32 %v722, 0.5
      %v725 = vadd.f32 %v723, 0.5
      %v726 = vmul.f32 %v716, 0.5
      %v727 = vmul.f32 %v717, 0.5
      %v728 = vtanh.pop %v726
      %v729 = vtanh.pop %v727
      %v730 = vmul.f32 %v728, 0.5
      %v731 = vmul.f32 %v729, 0.5
      %v732 = vadd.f32 %v730, 0.5
      %v733 = vadd.f32 %v731, 0.5
      %v734 = vtanh.pop %v732
      %v735 = vtanh.pop %v733
      %v736 = vld [vmem:[%s10] sm:$0xff]
      %v737 = vld [vmem:[%s11] sm:$0xff]
      %739 = vset.pattern.permute.xlu0 0
      %740 = vperm.xlu0 %739, %v737
      %v741 = vpop.permute.xlu0 %740
      %vm743 = vcmask 64512
      %v745 = vsel %vm743, %v736, 0
      %747 = vmatpush.msra.mxu0 0.0
      %748 = vmatpush.msra.mxu0 0.0
      %749 = vmatpush.msra.mxu0 0.0
      %750 = vmatpush.msra.mxu0 0.0
      %751 = vmatpush.msra.mxu0 0.0
      %752 = vmatpush.msra.mxu0 0.0
      %753 = vmatpush.msra.mxu0 0.0
      %754 = vmatpush.msra.mxu0 0.0
      %755 = vmatpush.msra.mxu0 0.0
      %756 = vmatpush.msra.mxu0 0.0
      %757 = vmatpush.msra.mxu0 0.0
      %758 = vmatpush.msra.mxu0 0.0
      %759 = vmatpush.msra.mxu0 0.0
      %760 = vmatpush.msra.mxu0 0.0
      %761 = vmatpush.msra.mxu0 0.0
      %762 = vmatpush.msra.mxu0 %v734
      %763 = vmatmul.f32.gmra.mxu0 %v745
      %v764 = vpop.f32.mrf.mxu0
      %v765 = vadd.f32 %v741, %v764
      %766 = vdwg.mxu0
      %767 = vmatpush.msra.mxu0 0.0
      %768 = vmatpush.msra.mxu0 0.0
      %769 = vmatpush.msra.mxu0 0.0
      %770 = vmatpush.msra.mxu0 0.0
      %771 = vmatpush.msra.mxu0 0.0
      %772 = vmatpush.msra.mxu0 0.0
      %773 = vmatpush.msra.mxu0 0.0
      %774 = vmatpush.msra.mxu0 0.0
      %775 = vmatpush.msra.mxu0 0.0
      %776 = vmatpush.msra.mxu0 0.0
      %777 = vmatpush.msra.mxu0 0.0
      %778 = vmatpush.msra.mxu0 0.0
      %779 = vmatpush.msra.mxu0 0.0
      %780 = vmatpush.msra.mxu0 0.0
      %781 = vmatpush.msra.mxu0 0.0
      %782 = vmatpush.msra.mxu0 %v735
      %783 = vmatmul.f32.gmra.mxu0 %v745
      %v784 = vpop.f32.mrf.mxu0
      %v785 = vadd.f32 %v741, %v784
      %786 = vdwg.mxu0
      %v787 = vmul.f32 %v724, %v765
      %v788 = vmul.f32 %v725, %v785
      %789 = vst [vmem:[%s523] sm:$0xff] %v787
      %790 = vst [vmem:[%s523 + $0x8] sm:$0xff] %v788
      %s791 = smul.u32 2, %s28
      %p792 = scmp.lt.s32.totalorder %s27, 1
      %s793 = scalar_select %p792, %s27, 1
      %p794 = scmp.lt.s32.totalorder %s791, 1
      %s795 = scalar_select %p794, %s791, 1
      %s796 = smul.addr %s793, 2
      %s797 = sadd.s32 %s795, %s796
      %s798 = smul.addr %s797, 8
      %s799 = scalar_lea.vmem %s12, %s798
      // Predicated region
      $region69: #{model_forward.3} parent=67 // pred_check
        %p800 = pneg %p328
      $region70: #{model_forward.3} parent=67 // pred_check_branch
        %802 = sbr.rel (%p800) target = $region72
      $region71: #{model_forward.3} parent=67 // pred_region
        %s803 = smul.u32 2, %s28
      $region72: #{model_forward.3} parent=67 // pred_fallthru
        _
    $region68: #{model_forward.3} parent=5 // pred_fallthru
      _
    %p804 = scmp.le.s32.totalorder 2, %s18
    // Predicated region
    $region73: #{model_forward.3} parent=5 // pred_check
      %p805 = pneg %p804
    $region74: #{model_forward.3} parent=5 // pred_check_branch
      %807 = sbr.rel (%p805) target = $region76
    $region75: #{model_forward.3} parent=5 // pred_region
      %s808 = ssub.s32 %s18, 2
      // Predicated region
      $region77: #{model_forward.3} parent=75 // pred_check
        %p809 = pneg %p334
      $region78: #{model_forward.3} parent=75 // pred_check_branch
        %811 = sbr.rel (%p809) target = $region80
      $region79: #{model_forward.3} parent=75 // pred_region
        %s812 = smul.u32 2, %s30
        %p813 = scmp.lt.s32.totalorder %s29, 1
        %s814 = scalar_select %p813, %s29, 1
        %p815 = scmp.lt.s32.totalorder %s812, 1
        %s816 = scalar_select %p815, %s812, 1
        %s817 = smul.addr %s814, 2
        %s818 = sadd.s32 %s816, %s817
        %s819 = smul.addr %s818, 8
        %s820 = scalar_lea.vmem %s12, %s819
      $region80: #{model_forward.3} parent=75 // pred_fallthru
        _
    $region76: #{model_forward.3} parent=5 // pred_fallthru
      _
  $region6: #{model_forward.3} parent=0 // loop_footer
    %s22 = sadd.s32 1, %s18
  $region7: #{model_forward.3} parent=0 // loop_footer_branch
    %17 = sbr.rel target = $region3
  $region8: #{model_forward.3} parent=0 // loop_exit
    _

// kernel: model_forward.2
$region0: #{model_forward.2}
  #allocation0 [shape = 'u32[]', space=smem, size = 0x4, offset = 0x4, fixed_abs, tag = 'smem constant byte address 0x4 - core index']
  #allocation1 [shape = 'u32[72,128]{1,0:T(1,128)}', space=vmem, size = 0x9000, scoped, tag = 'internal scratch']
  %s0 = inlined_call_operand.vmem [shape: f32[2,3,256], index: 0, kind: input, shape index: {}]
  %s1 = inlined_call_operand.vmem [shape: f32[2,3,256], index: 1, kind: input, shape index: {}]
  %s2 = inlined_call_operand.vmem [shape: f32[2,3,256], index: 2, kind: input, shape index: {}]
  %s3 = inlined_call_operand.vmem [shape: f32[8,3], index: 3, kind: input, shape index: {}]
  %s4 = inlined_call_operand.vmem [shape: f32[8,3], index: 4, kind: input, shape index: {}]
  %s5 = inlined_call_operand.vmem [shape: f32[8,3], index: 5, kind: input, shape index: {}]
  %s6 = inlined_call_operand.vmem [shape: f32[2,8,1], index: 6, kind: output, shape index: {0}]
  %s7 = inlined_call_operand.vmem [shape: f32[2,8,1], index: 7, kind: output, shape index: {1}]
  %s8 = inlined_call_operand.vmem [shape: f32[2,8,1], index: 8, kind: output, shape index: {2}]
  %s9 = inlined_call_operand.vmem [shape: f32[2,8,1], index: 9, kind: output, shape index: {3}]
  %10 = xla_tuple %s6, %s7, %s8, %s9
  %s11 = sld [smem:[#allocation0]]
  $region85: #{model_forward.2} parent=0
    _
  %s13 = ssub.s32 1, %s11
  %s14 = scalar_select 0, %s13, %s11
  loop: start=0, step=1, limit=4
  $region2: #{model_forward.2} parent=0 // loop_pre_header
    _
  $region3: #{model_forward.2} parent=0 // loop_header
    %s16 = sphi 0, %s20
    %p17 = scmp.ge.s32.totalorder %s16, 4
    %s23 = sphi 0, %s35
    %s24 = sphi 0, %s31
    %s25 = sphi 0, %s23
    %s26 = sphi 0, %s24
    %s27 = sphi 0, %s25
    %s28 = sphi 0, %s26
    %s40 = sphi 0, %s42
    %s43 = sphi 0, %s40
    %s44 = sphi 0, %s43
    %s60 = sphi 0, %s44
    %s68 = sphi 0, %s70
    %s71 = sphi 0, %s68
    %s72 = sphi 0, %s71
    %s88 = sphi 0, %s72
    %s96 = sphi 0, %s98
    %s99 = sphi 0, %s96
    %s100 = sphi 0, %s99
    %s116 = sphi 0, %s100
    %s120 = sphi 0, %s120
    %s122 = sphi 0, %s120
    %s123 = sphi 0, %s122
    %s137 = sphi 0, %s123
    %s141 = sphi 0, %s141
    %s143 = sphi 0, %s141
    %s144 = sphi 0, %s143
    %s158 = sphi 0, %s144
    %s162 = sphi 0, %s162
    %s164 = sphi 0, %s162
    %s165 = sphi 0, %s164
    %s179 = sphi 0, %s165
    %s185 = sphi 0, %s187
    %s188 = sphi 0, %s185
    %s189 = sphi 0, %s188
    %s205 = sphi 0, %s189
    %s211 = sphi 0, %s213
    %s214 = sphi 0, %s211
    %s215 = sphi 0, %s214
    %s231 = sphi 0, %s215
    %s237 = sphi 0, %s239
    %s240 = sphi 0, %s237
    %s241 = sphi 0, %s240
    %s257 = sphi 0, %s241
    %s263 = sphi 0, %s265
    %s266 = sphi 0, %s263
    %s267 = sphi 0, %s266
    %s283 = sphi 0, %s267
  $region4: #{model_forward.2} parent=0 // loop_header_branch
    %19 = sbr.rel (%p17) target = $region8
  $region5: #{model_forward.2} parent=0 // loop_body
    %s21 = ssub.s32 %s16, 1
    %s22 = ssub.s32 %s16, 2
    %s29 = sadd.s32 1, %s24
    %p30 = scmp.ge.s32.totalorder %s29, 1
    %s31 = scalar_select %p30, 0, %s29
    %s32 = sadd.s32 1, %s23
    %s33 = scalar_select %p30, %s32, %s23
    %p34 = scmp.ge.s32.totalorder %s33, 2
    %s35 = scalar_select %p34, 0, %s33
    %s36 = ssub.s32 %s23, %s35
    %s37 = ssub.s32 %s24, %s31
    %s38 = sor.u32 %s36, %s37
    %p39 = scmp.eq.s32.totalorder %s38, 0
    %s41 = sadd.s32 %s40, 1
    %s42 = scalar_select %p39, %s40, %s41
    %p45 = pneg %p39
    %p46 = scmp.eq.s32.totalorder %s16, 1
    %p47 = por %p45, %p46
    %p48 = scmp.ne.s32.totalorder %s40, %s43
    %p49 = scmp.eq.s32.totalorder %s16, 0
    %p50 = por %p48, %p49
    %p51 = scmp.ne.s32.totalorder %s40, %s43
    %p52 = scmp.eq.s32.totalorder %s21, 1
    %p53 = por %p51, %p52
    %p54 = scmp.ne.s32.totalorder %s43, %s44
    %p55 = scmp.eq.s32.totalorder %s21, 0
    %p56 = por %p54, %p55
    %p57 = scmp.ne.s32.totalorder %s43, %s44
    %p58 = scmp.eq.s32.totalorder %s22, 1
    %p59 = por %p57, %p58
    %p61 = scmp.ne.s32.totalorder %s44, %s60
    %p62 = scmp.eq.s32.totalorder %s22, 0
    %p63 = por %p61, %p62
    %s64 = ssub.s32 %s23, %s35
    %s65 = ssub.s32 %s24, %s31
    %s66 = sor.u32 %s64, %s65
    %p67 = scmp.eq.s32.totalorder %s66, 0
    %s69 = sadd.s32 %s68, 1
    %s70 = scalar_select %p67, %s68, %s69
    %p73 = pneg %p67
    %p74 = scmp.eq.s32.totalorder %s16, 1
    %p75 = por %p73, %p74
    %p76 = scmp.ne.s32.totalorder %s68, %s71
    %p77 = scmp.eq.s32.totalorder %s16, 0
    %p78 = por %p76, %p77
    %p79 = scmp.ne.s32.totalorder %s68, %s71
    %p80 = scmp.eq.s32.totalorder %s21, 1
    %p81 = por %p79, %p80
    %p82 = scmp.ne.s32.totalorder %s71, %s72
    %p83 = scmp.eq.s32.totalorder %s21, 0
    %p84 = por %p82, %p83
    %p85 = scmp.ne.s32.totalorder %s71, %s72
    %p86 = scmp.eq.s32.totalorder %s22, 1
    %p87 = por %p85, %p86
    %p89 = scmp.ne.s32.totalorder %s72, %s88
    %p90 = scmp.eq.s32.totalorder %s22, 0
    %p91 = por %p89, %p90
    %s92 = ssub.s32 %s23, %s35
    %s93 = ssub.s32 %s24, %s31
    %s94 = sor.u32 %s92, %s93
    %p95 = scmp.eq.s32.totalorder %s94, 0
    %s97 = sadd.s32 %s96, 1
    %s98 = scalar_select %p95, %s96, %s97
    %p101 = pneg %p95
    %p102 = scmp.eq.s32.totalorder %s16, 1
    %p103 = por %p101, %p102
    %p104 = scmp.ne.s32.totalorder %s96, %s99
    %p105 = scmp.eq.s32.totalorder %s16, 0
    %p106 = por %p104, %p105
    %p107 = scmp.ne.s32.totalorder %s96, %s99
    %p108 = scmp.eq.s32.totalorder %s21, 1
    %p109 = por %p107, %p108
    %p110 = scmp.ne.s32.totalorder %s99, %s100
    %p111 = scmp.eq.s32.totalorder %s21, 0
    %p112 = por %p110, %p111
    %p113 = scmp.ne.s32.totalorder %s99, %s100
    %p114 = scmp.eq.s32.totalorder %s22, 1
    %p115 = por %p113, %p114
    %p117 = scmp.ne.s32.totalorder %s100, %s116
    %p118 = scmp.eq.s32.totalorder %s22, 0
    %p119 = por %p117, %p118
    %s121 = sadd.s32 %s120, 1
    %p124 = scmp.eq.s32.totalorder %s16, 1
    %p125 = scmp.ne.s32.totalorder %s120, %s122
    %p126 = scmp.eq.s32.totalorder %s16, 0
    %p127 = por %p125, %p126
    %p128 = scmp.ne.s32.totalorder %s120, %s122
    %p129 = scmp.eq.s32.totalorder %s21, 1
    %p130 = por %p128, %p129
    %p131 = scmp.ne.s32.totalorder %s122, %s123
    %p132 = scmp.eq.s32.totalorder %s21, 0
    %p133 = por %p131, %p132
    %p134 = scmp.ne.s32.totalorder %s122, %s123
    %p135 = scmp.eq.s32.totalorder %s22, 1
    %p136 = por %p134, %p135
    %p138 = scmp.ne.s32.totalorder %s123, %s137
    %p139 = scmp.eq.s32.totalorder %s22, 0
    %p140 = por %p138, %p139
    %s142 = sadd.s32 %s141, 1
    %p145 = scmp.eq.s32.totalorder %s16, 1
    %p146 = scmp.ne.s32.totalorder %s141, %s143
    %p147 = scmp.eq.s32.totalorder %s16, 0
    %p148 = por %p146, %p147
    %p149 = scmp.ne.s32.totalorder %s141, %s143
    %p150 = scmp.eq.s32.totalorder %s21, 1
    %p151 = por %p149, %p150
    %p152 = scmp.ne.s32.totalorder %s143, %s144
    %p153 = scmp.eq.s32.totalorder %s21, 0
    %p154 = por %p152, %p153
    %p155 = scmp.ne.s32.totalorder %s143, %s144
    %p156 = scmp.eq.s32.totalorder %s22, 1
    %p157 = por %p155, %p156
    %p159 = scmp.ne.s32.totalorder %s144, %s158
    %p160 = scmp.eq.s32.totalorder %s22, 0
    %p161 = por %p159, %p160
    %s163 = sadd.s32 %s162, 1
    %p166 = scmp.eq.s32.totalorder %s16, 1
    %p167 = scmp.ne.s32.totalorder %s162, %s164
    %p168 = scmp.eq.s32.totalorder %s16, 0
    %p169 = por %p167, %p168
    %p170 = scmp.ne.s32.totalorder %s162, %s164
    %p171 = scmp.eq.s32.totalorder %s21, 1
    %p172 = por %p170, %p171
    %p173 = scmp.ne.s32.totalorder %s164, %s165
    %p174 = scmp.eq.s32.totalorder %s21, 0
    %p175 = por %p173, %p174
    %p176 = scmp.ne.s32.totalorder %s164, %s165
    %p177 = scmp.eq.s32.totalorder %s22, 1
    %p178 = por %p176, %p177
    %p180 = scmp.ne.s32.totalorder %s165, %s179
    %p181 = scmp.eq.s32.totalorder %s22, 0
    %p182 = por %p180, %p181
    %s183 = ssub.s32 %s23, %s35
    %p184 = scmp.eq.s32.totalorder %s183, 0
    %s186 = sadd.s32 %s185, 1
    %s187 = scalar_select %p184, %s185, %s186
    %p190 = pneg %p184
    %p191 = scmp.eq.s32.totalorder %s16, 1
    %p192 = por %p190, %p191
    %p193 = scmp.ne.s32.totalorder %s185, %s188
    %p194 = scmp.eq.s32.totalorder %s16, 0
    %p195 = por %p193, %p194
    %p196 = scmp.ne.s32.totalorder %s185, %s188
    %p197 = scmp.eq.s32.totalorder %s21, 1
    %p198 = por %p196, %p197
    %p199 = scmp.ne.s32.totalorder %s188, %s189
    %p200 = scmp.eq.s32.totalorder %s21, 0
    %p201 = por %p199, %p200
    %p202 = scmp.ne.s32.totalorder %s188, %s189
    %p203 = scmp.eq.s32.totalorder %s22, 1
    %p204 = por %p202, %p203
    %p206 = scmp.ne.s32.totalorder %s189, %s205
    %p207 = scmp.eq.s32.totalorder %s22, 0
    %p208 = por %p206, %p207
    %s209 = ssub.s32 %s23, %s35
    %p210 = scmp.eq.s32.totalorder %s209, 0
    %s212 = sadd.s32 %s211, 1
    %s213 = scalar_select %p210, %s211, %s212
    %p216 = pneg %p210
    %p217 = scmp.eq.s32.totalorder %s16, 1
    %p218 = por %p216, %p217
    %p219 = scmp.ne.s32.totalorder %s211, %s214
    %p220 = scmp.eq.s32.totalorder %s16, 0
    %p221 = por %p219, %p220
    %p222 = scmp.ne.s32.totalorder %s211, %s214
    %p223 = scmp.eq.s32.totalorder %s21, 1
    %p224 = por %p222, %p223
    %p225 = scmp.ne.s32.totalorder %s214, %s215
    %p226 = scmp.eq.s32.totalorder %s21, 0
    %p227 = por %p225, %p226
    %p228 = scmp.ne.s32.totalorder %s214, %s215
    %p229 = scmp.eq.s32.totalorder %s22, 1
    %p230 = por %p228, %p229
    %p232 = scmp.ne.s32.totalorder %s215, %s231
    %p233 = scmp.eq.s32.totalorder %s22, 0
    %p234 = por %p232, %p233
    %s235 = ssub.s32 %s23, %s35
    %p236 = scmp.eq.s32.totalorder %s235, 0
    %s238 = sadd.s32 %s237, 1
    %s239 = scalar_select %p236, %s237, %s238
    %p242 = pneg %p236
    %p243 = scmp.eq.s32.totalorder %s16, 1
    %p244 = por %p242, %p243
    %p245 = scmp.ne.s32.totalorder %s237, %s240
    %p246 = scmp.eq.s32.totalorder %s16, 0
    %p247 = por %p245, %p246
    %p248 = scmp.ne.s32.totalorder %s237, %s240
    %p249 = scmp.eq.s32.totalorder %s21, 1
    %p250 = por %p248, %p249
    %p251 = scmp.ne.s32.totalorder %s240, %s241
    %p252 = scmp.eq.s32.totalorder %s21, 0
    %p253 = por %p251, %p252
    %p254 = scmp.ne.s32.totalorder %s240, %s241
    %p255 = scmp.eq.s32.totalorder %s22, 1
    %p256 = por %p254, %p255
    %p258 = scmp.ne.s32.totalorder %s241, %s257
    %p259 = scmp.eq.s32.totalorder %s22, 0
    %p260 = por %p258, %p259
    %s261 = ssub.s32 %s23, %s35
    %p262 = scmp.eq.s32.totalorder %s261, 0
    %s264 = sadd.s32 %s263, 1
    %s265 = scalar_select %p262, %s263, %s264
    %p268 = pneg %p262
    %p269 = scmp.eq.s32.totalorder %s16, 1
    %p270 = por %p268, %p269
    %p271 = scmp.ne.s32.totalorder %s263, %s266
    %p272 = scmp.eq.s32.totalorder %s16, 0
    %p273 = por %p271, %p272
    %p274 = scmp.ne.s32.totalorder %s263, %s266
    %p275 = scmp.eq.s32.totalorder %s21, 1
    %p276 = por %p274, %p275
    %p277 = scmp.ne.s32.totalorder %s266, %s267
    %p278 = scmp.eq.s32.totalorder %s21, 0
    %p279 = por %p277, %p278
    %p280 = scmp.ne.s32.totalorder %s266, %s267
    %p281 = scmp.eq.s32.totalorder %s22, 1
    %p282 = por %p280, %p281
    %p284 = scmp.ne.s32.totalorder %s267, %s283
    %p285 = scmp.eq.s32.totalorder %s22, 0
    %p286 = por %p284, %p285
    %p287 = scmp.le.s32.totalorder 1, %s16
    %p288 = scmp.lt.s32.totalorder %s16, 3
    %p289 = pnand %p287, %p288
    %p290 = pneg %p289
    // Predicated region
    $region9: #{model_forward.2} parent=5 // pred_check
      _
    $region10: #{model_forward.2} parent=5 // pred_check_branch
      %292 = sbr.rel (%p289) target = $region12
    $region11: #{model_forward.2} parent=5 // pred_region
      %s293 = ssub.s32 %s16, 1
      // Predicated region
      $region13: #{model_forward.2} parent=11 // pred_check
        %p294 = pneg %p133
      $region14: #{model_forward.2} parent=11 // pred_check_branch
        %296 = sbr.rel (%p294) target = $region16
      $region15: #{model_forward.2} parent=11 // pred_region
        _
      $region16: #{model_forward.2} parent=11 // pred_fallthru
        _
      // Predicated region
      $region17: #{model_forward.2} parent=11 // pred_check
        %p297 = pneg %p154
      $region18: #{model_forward.2} parent=11 // pred_check_branch
        %299 = sbr.rel (%p297) target = $region20
      $region19: #{model_forward.2} parent=11 // pred_region
        _
      $region20: #{model_forward.2} parent=11 // pred_fallthru
        _
      // Predicated region
      $region21: #{model_forward.2} parent=11 // pred_check
        %p300 = pneg %p175
      $region22: #{model_forward.2} parent=11 // pred_check_branch
        %302 = sbr.rel (%p300) target = $region24
      $region23: #{model_forward.2} parent=11 // pred_region
        _
      $region24: #{model_forward.2} parent=11 // pred_fallthru
        _
    $region12: #{model_forward.2} parent=5 // pred_fallthru
      _
    %p303 = scmp.lt.s32.totalorder %s16, 2
    // Predicated region
    $region25: #{model_forward.2} parent=5 // pred_check
      %p304 = pneg %p303
    $region26: #{model_forward.2} parent=5 // pred_check_branch
      %306 = sbr.rel (%p304) target = $region28
    $region27: #{model_forward.2} parent=5 // pred_region
      // Predicated region
      $region29: #{model_forward.2} parent=27 // pred_check
        %p307 = pneg %p50
      $region30: #{model_forward.2} parent=27 // pred_check_branch
        %309 = sbr.rel (%p307) target = $region32
      $region31: #{model_forward.2} parent=27 // pred_region
        %s310 = smul.u32 2, %s24
        %p311 = scmp.lt.s32.totalorder %s23, 1
        %s312 = scalar_select %p311, %s23, 1
        %p313 = scmp.lt.s32.totalorder %s310, 1
        %s314 = scalar_select %p313, %s310, 1
        %s315 = smul.addr %s312, 2
        %s316 = sadd.s32 %s314, %s315
        %s317 = smul.addr %s316, 4
        %s318 = scalar_lea.vmem %s0, %s317
        %s319 = smul.u32 2, %s24
      $region32: #{model_forward.2} parent=27 // pred_fallthru
        _
      // Predicated region
      $region33: #{model_forward.2} parent=27 // pred_check
        %p320 = pneg %p78
      $region34: #{model_forward.2} parent=27 // pred_check_branch
        %322 = sbr.rel (%p320) target = $region36
      $region35: #{model_forward.2} parent=27 // pred_region
        %s323 = smul.u32 2, %s24
        %p324 = scmp.lt.s32.totalorder %s23, 1
        %s325 = scalar_select %p324, %s23, 1
        %p326 = scmp.lt.s32.totalorder %s323, 1
        %s327 = scalar_select %p326, %s323, 1
        %s328 = smul.addr %s325, 2
        %s329 = sadd.s32 %s327, %s328
        %s330 = smul.addr %s329, 4
        %s331 = scalar_lea.vmem %s1, %s330
        %s332 = smul.u32 2, %s24
      $region36: #{model_forward.2} parent=27 // pred_fallthru
        _
      // Predicated region
      $region37: #{model_forward.2} parent=27 // pred_check
        %p333 = pneg %p106
      $region38: #{model_forward.2} parent=27 // pred_check_branch
        %335 = sbr.rel (%p333) target = $region40
      $region39: #{model_forward.2} parent=27 // pred_region
        %s336 = smul.u32 2, %s24
        %p337 = scmp.lt.s32.totalorder %s23, 1
        %s338 = scalar_select %p337, %s23, 1
        %p339 = scmp.lt.s32.totalorder %s336, 1
        %s340 = scalar_select %p339, %s336, 1
        %s341 = smul.addr %s338, 2
        %s342 = sadd.s32 %s340, %s341
        %s343 = smul.addr %s342, 4
        %s344 = scalar_lea.vmem %s2, %s343
        %s345 = smul.u32 2, %s24
      $region40: #{model_forward.2} parent=27 // pred_fallthru
        _
    $region28: #{model_forward.2} parent=5 // pred_fallthru
      _
    %p346 = scmp.le.s32.totalorder 1, %s16
    %p347 = scmp.lt.s32.totalorder %s16, 3
    %p348 = pnand %p346, %p347
    %p349 = pneg %p348
    // Predicated region
    $region41: #{model_forward.2} parent=5 // pred_check
      _
    $region42: #{model_forward.2} parent=5 // pred_check_branch
      %351 = sbr.rel (%p348) target = $region44
    $region43: #{model_forward.2} parent=5 // pred_region
      %s352 = ssub.s32 %s16, 1
      %s353 = smul.u32 2, %s26
      %p354 = scmp.lt.s32.totalorder %s25, 1
      %s355 = scalar_select %p354, %s25, 1
      %p356 = scmp.lt.s32.totalorder %s353, 1
      %s357 = scalar_select %p356, %s353, 1
      %s358 = smul.addr %s355, 2
      %s359 = sadd.s32 %s357, %s358
      %s360 = smul.addr %s359, 4
      %s361 = scalar_lea.vmem %s0, %s360
      %p362 = pneg %p56
      %p363 = pneg %p53
      %s364 = smul.u32 2, %s26
      %p365 = scmp.lt.s32.totalorder %s25, 1
      %s366 = scalar_select %p365, %s25, 1
      %p367 = scmp.lt.s32.totalorder %s364, 1
      %s368 = scalar_select %p367, %s364, 1
      %s369 = smul.addr %s366, 2
      %s370 = sadd.s32 %s368, %s369
      %s371 = smul.addr %s370, 4
      %s372 = scalar_lea.vmem %s1, %s371
      %p373 = pneg %p84
      %p374 = pneg %p81
      %s375 = smul.u32 2, %s26
      %p376 = scmp.lt.s32.totalorder %s25, 1
      %s377 = scalar_select %p376, %s25, 1
      %p378 = scmp.lt.s32.totalorder %s375, 1
      %s379 = scalar_select %p378, %s375, 1
      %s380 = smul.addr %s377, 2
      %s381 = sadd.s32 %s379, %s380
      %s382 = smul.addr %s381, 4
      %s383 = scalar_lea.vmem %s2, %s382
      %p384 = pneg %p112
      %p385 = pneg %p109
      %p386 = pneg %p133
      %p387 = pneg %p130
      %p388 = pneg %p154
      %p389 = pneg %p151
      %p390 = pneg %p175
      %p391 = pneg %p172
      %p392 = pneg %p201
      %p393 = pneg %p198
      %p394 = scmp.lt.s32.totalorder %s25, 1
      %s395 = scalar_select %p394, %s25, 1
      %s396 = smul.addr %s395, 8
      %s397 = scalar_lea.vmem %s6, %s396
      %p398 = pneg %p227
      %p399 = pneg %p224
      %p400 = scmp.lt.s32.totalorder %s25, 1
      %s401 = scalar_select %p400, %s25, 1
      %s402 = smul.addr %s401, 8
      %s403 = scalar_lea.vmem %s7, %s402
      %p404 = pneg %p253
      %p405 = pneg %p250
      %p406 = scmp.lt.s32.totalorder %s25, 1
      %s407 = scalar_select %p406, %s25, 1
      %s408 = smul.addr %s407, 8
      %s409 = scalar_lea.vmem %s8, %s408
      %p410 = pneg %p279
      %p411 = pneg %p276
      %p412 = scmp.lt.s32.totalorder %s25, 1
      %s413 = scalar_select %p412, %s25, 1
      %s414 = smul.addr %s413, 8
      %s415 = scalar_lea.vmem %s9, %s414
      %s416 = smul.u32 2, %s26
      %p417 = scmp.lt.s32.totalorder %s25, 1
      %s418 = scalar_select %p417, %s25, 1
      %p419 = scmp.lt.s32.totalorder %s416, 1
      %s420 = scalar_select %p419, %s416, 1
      %s421 = smul.addr %s418, 2
      %s422 = sadd.s32 %s420, %s421
      %s423 = smul.addr %s422, 4
      %s424 = scalar_lea.vmem %s0, %s423
      %s425 = smul.u32 2, %s26
      %s426 = smul.u32 2, %s26
      %p427 = scmp.lt.s32.totalorder %s25, 1
      %s428 = scalar_select %p427, %s25, 1
      %p429 = scmp.lt.s32.totalorder %s426, 1
      %s430 = scalar_select %p429, %s426, 1
      %s431 = smul.addr %s428, 2
      %s432 = sadd.s32 %s430, %s431
      %s433 = smul.addr %s432, 4
      %s434 = scalar_lea.vmem %s1, %s433
      %s435 = smul.u32 2, %s26
      %s436 = smul.u32 2, %s26
      %p437 = scmp.lt.s32.totalorder %s25, 1
      %s438 = scalar_select %p437, %s25, 1
      %p439 = scmp.lt.s32.totalorder %s436, 1
      %s440 = scalar_select %p439, %s436, 1
      %s441 = smul.addr %s438, 2
      %s442 = sadd.s32 %s440, %s441
      %s443 = smul.addr %s442, 4
      %s444 = scalar_lea.vmem %s2, %s443
      %s445 = smul.u32 2, %s26
      %p446 = scmp.lt.s32.totalorder %s25, 1
      %s447 = scalar_select %p446, %s25, 1
      %s448 = smul.addr %s447, 8
      %s449 = scalar_lea.vmem %s6, %s448
      %p450 = scmp.lt.s32.totalorder %s25, 1
      %s451 = scalar_select %p450, %s25, 1
      %s452 = smul.addr %s451, 8
      %s453 = scalar_lea.vmem %s7, %s452
      %p454 = scmp.lt.s32.totalorder %s25, 1
      %s455 = scalar_select %p454, %s25, 1
      %s456 = smul.addr %s455, 8
      %s457 = scalar_lea.vmem %s8, %s456
      %p458 = scmp.lt.s32.totalorder %s25, 1
      %s459 = scalar_select %p458, %s25, 1
      %s460 = smul.addr %s459, 8
      %s461 = scalar_lea.vmem %s9, %s460
      %p462 = scmp.eq.s32.totalorder %s26, 0
      // Predicated region
      $region45: #{model_forward.2} parent=43 // pred_check
        %p463 = pneg %p462
      $region46: #{model_forward.2} parent=43 // pred_check_branch
        %465 = sbr.rel (%p463) target = $region48
      $region47: #{model_forward.2} parent=43 // pred_region
        %vm466 = vcmask 7168
        %467 = vst.msk [vmem:[%s449] sm:$0xff] %vm466, 0.0
        %468 = vst.msk [vmem:[%s453] sm:$0xff] %vm466, 0.0
        %469 = vst.msk [vmem:[%s457] sm:$0xff] %vm466, 0.0
        %470 = vst.msk [vmem:[%s461] sm:$0xff] %vm466, 0.0
      $region48: #{model_forward.2} parent=43 // pred_fallthru
        _
      %v471 = vld [vmem:[%s4] sm:$0xff]
      %v472 = vld [vmem:[%s434] sm:$0x77]
      %474 = vst [vmem:[#allocation1] ss:$2 sm:$0xff] %v472
      %v475 = vld.sshfl [vmem:[#allocation1] sm:$0xff pattern:$0x75316420]
      %v476 = vld.sshfl [vmem:[#allocation1 + $0x8] sm:$0xff pattern:$0x75316420]
      %vm477 = vcmask 23552
      %v479 = vsel %vm477, %v471, 0
      %vm481 = vcmask 1042432
      %v482 = vsel %vm481, %v475, 0
      %v484 = vsel %vm481, %v476, 0
      %486 = vmatpush.msra.mxu0 0.0
      %487 = vmatpush.msra.mxu0 0.0
      %488 = vmatpush.msra.mxu0 0.0
      %489 = vmatpush.msra.mxu0 0.0
      %490 = vmatpush.msra.mxu0 0.0
      %491 = vmatpush.msra.mxu0 0.0
      %492 = vmatpush.msra.mxu0 0.0
      %493 = vmatpush.msra.mxu0 0.0
      %494 = vmatpush.msra.mxu0 0.0
      %495 = vmatpush.msra.mxu0 0.0
      %496 = vmatpush.msra.mxu0 0.0
      %497 = vmatpush.msra.mxu0 0.0
      %498 = vmatpush.msra.mxu0 0.0
      %499 = vmatpush.msra.mxu0 0.0
      %500 = vmatpush.msra.mxu0 0.0
      %501 = vmatpush.msra.mxu0 %v482
      %502 = vmatmul.f32.gmra.mxu0 %v479
      %v503 = vpop.f32.mrf.mxu0
      %v504 = vadd.f32 0.0, %v503
      %505 = vdwg.mxu0
      %506 = vmatpush.msra.mxu0 0.0
      %507 = vmatpush.msra.mxu0 0.0
      %508 = vmatpush.msra.mxu0 0.0
      %509 = vmatpush.msra.mxu0 0.0
      %510 = vmatpush.msra.mxu0 0.0
      %511 = vmatpush.msra.mxu0 0.0
      %512 = vmatpush.msra.mxu0 0.0
      %513 = vmatpush.msra.mxu0 0.0
      %514 = vmatpush.msra.mxu0 0.0
      %515 = vmatpush.msra.mxu0 0.0
      %516 = vmatpush.msra.mxu0 0.0
      %517 = vmatpush.msra.mxu0 0.0
      %518 = vmatpush.msra.mxu0 0.0
      %519 = vmatpush.msra.mxu0 0.0
      %520 = vmatpush.msra.mxu0 0.0
      %521 = vmatpush.msra.mxu0 %v484
      %522 = vmatmul.f32.gmra.mxu0 %v479
      %v523 = vpop.f32.mrf.mxu0
      %v524 = vadd.f32 0.0, %v523
      %525 = vdwg.mxu0
      %v526 = vld [vmem:[%s3] sm:$0xff]
      %v527 = vld [vmem:[%s424] sm:$0x77]
      %529 = vst [vmem:[#allocation1] ss:$2 sm:$0xff] %v527
      %v530 = vld.sshfl [vmem:[#allocation1] sm:$0xff pattern:$0x75316420]
      %v531 = vld.sshfl [vmem:[#allocation1 + $0x8] sm:$0xff pattern:$0x75316420]
      %v533 = vsel %vm477, %v526, 0
      %v535 = vsel %vm481, %v530, 0
      %v537 = vsel %vm481, %v531, 0
      %539 = vmatpush.msra.mxu0 0.0
      %540 = vmatpush.msra.mxu0 0.0
      %541 = vmatpush.msra.mxu0 0.0
      %542 = vmatpush.msra.mxu0 0.0
      %543 = vmatpush.msra.mxu0 0.0
      %544 = vmatpush.msra.mxu0 0.0
      %545 = vmatpush.msra.mxu0 0.0
      %546 = vmatpush.msra.mxu0 0.0
      %547 = vmatpush.msra.mxu0 0.0
      %548 = vmatpush.msra.mxu0 0.0
      %549 = vmatpush.msra.mxu0 0.0
      %550 = vmatpush.msra.mxu0 0.0
      %551 = vmatpush.msra.mxu0 0.0
      %552 = vmatpush.msra.mxu0 0.0
      %553 = vmatpush.msra.mxu0 0.0
      %554 = vmatpush.msra.mxu0 %v535
      %555 = vmatmul.f32.gmra.mxu0 %v533
      %v556 = vpop.f32.mrf.mxu0
      %v557 = vadd.f32 %v504, %v556
      %558 = vdwg.mxu0
      %559 = vmatpush.msra.mxu0 0.0
      %560 = vmatpush.msra.mxu0 0.0
      %561 = vmatpush.msra.mxu0 0.0
      %562 = vmatpush.msra.mxu0 0.0
      %563 = vmatpush.msra.mxu0 0.0
      %564 = vmatpush.msra.mxu0 0.0
      %565 = vmatpush.msra.mxu0 0.0
      %566 = vmatpush.msra.mxu0 0.0
      %567 = vmatpush.msra.mxu0 0.0
      %568 = vmatpush.msra.mxu0 0.0
      %569 = vmatpush.msra.mxu0 0.0
      %570 = vmatpush.msra.mxu0 0.0
      %571 = vmatpush.msra.mxu0 0.0
      %572 = vmatpush.msra.mxu0 0.0
      %573 = vmatpush.msra.mxu0 0.0
      %574 = vmatpush.msra.mxu0 %v537
      %575 = vmatmul.f32.gmra.mxu0 %v533
      %v576 = vpop.f32.mrf.mxu0
      %v577 = vadd.f32 %v524, %v576
      %578 = vdwg.mxu0
      %v579 = vld [vmem:[%s5] sm:$0xff]
      %v580 = vld [vmem:[%s444] sm:$0x77]
      %582 = vst [vmem:[#allocation1] ss:$2 sm:$0xff] %v580
      %v583 = vld.sshfl [vmem:[#allocation1] sm:$0xff pattern:$0x75316420]
      %v584 = vld.sshfl [vmem:[#allocation1 + $0x8] sm:$0xff pattern:$0x75316420]
      %v586 = vsel %vm477, %v579, 0
      %v588 = vsel %vm481, %v583, 0
      %v590 = vsel %vm481, %v584, 0
      %592 = vmatpush.msra.mxu0 0.0
      %593 = vmatpush.msra.mxu0 0.0
      %594 = vmatpush.msra.mxu0 0.0
      %595 = vmatpush.msra.mxu0 0.0
      %596 = vmatpush.msra.mxu0 0.0
      %597 = vmatpush.msra.mxu0 0.0
      %598 = vmatpush.msra.mxu0 0.0
      %599 = vmatpush.msra.mxu0 0.0
      %600 = vmatpush.msra.mxu0 0.0
      %601 = vmatpush.msra.mxu0 0.0
      %602 = vmatpush.msra.mxu0 0.0
      %603 = vmatpush.msra.mxu0 0.0
      %604 = vmatpush.msra.mxu0 0.0
      %605 = vmatpush.msra.mxu0 0.0
      %606 = vmatpush.msra.mxu0 0.0
      %607 = vmatpush.msra.mxu0 %v588
      %608 = vmatmul.f32.gmra.mxu0 %v586
      %v609 = vpop.f32.mrf.mxu0
      %v610 = vadd.f32 %v504, %v609
      %611 = vdwg.mxu0
      %612 = vmatpush.msra.mxu0 0.0
      %613 = vmatpush.msra.mxu0 0.0
      %614 = vmatpush.msra.mxu0 0.0
      %615 = vmatpush.msra.mxu0 0.0
      %616 = vmatpush.msra.mxu0 0.0
      %617 = vmatpush.msra.mxu0 0.0
      %618 = vmatpush.msra.mxu0 0.0
      %619 = vmatpush.msra.mxu0 0.0
      %620 = vmatpush.msra.mxu0 0.0
      %621 = vmatpush.msra.mxu0 0.0
      %622 = vmatpush.msra.mxu0 0.0
      %623 = vmatpush.msra.mxu0 0.0
      %624 = vmatpush.msra.mxu0 0.0
      %625 = vmatpush.msra.mxu0 0.0
      %626 = vmatpush.msra.mxu0 0.0
      %627 = vmatpush.msra.mxu0 %v590
      %628 = vmatmul.f32.gmra.mxu0 %v586
      %v629 = vpop.f32.mrf.mxu0
      %v630 = vadd.f32 %v524, %v629
      %631 = vdwg.mxu0
      %v632 = vld [vmem:[%s449] sm:$0xff]
      %v633 = vadd.f32 %v557, %v577
      %634 = vadd.xlane.f32.xlu0 %v633
      %v635 = vpop.xlane.xlu0 %634
      %v636 = vadd.f32 %v632, %v635
      %vm637 = vcmask 7168
      %638 = vst.msk [vmem:[%s449] sm:$0xff] %vm637, %v636
      %v639 = vld [vmem:[%s453] sm:$0xff]
      %v640 = vadd.f32 %v610, %v630
      %641 = vadd.xlane.f32.xlu0 %v640
      %v642 = vpop.xlane.xlu0 %641
      %v643 = vadd.f32 %v639, %v642
      %644 = vst.msk [vmem:[%s453] sm:$0xff] %vm637, %v643
      %v645 = vld [vmem:[%s457] sm:$0xff]
      %v646 = vmul.f32 %v557, %v557
      %v647 = vmul.f32 %v577, %v577
      %v648 = vadd.f32 %v646, %v647
      %649 = vadd.xlane.f32.xlu0 %v648
      %v650 = vpop.xlane.xlu0 %649
      %v651 = vadd.f32 %v645, %v650
      %652 = vst.msk [vmem:[%s457] sm:$0xff] %vm637, %v651
      %v653 = vld [vmem:[%s461] sm:$0xff]
      %v654 = vmul.f32 %v610, %v610
      %v655 = vmul.f32 %v630, %v630
      %v656 = vadd.f32 %v654, %v655
      %657 = vadd.xlane.f32.xlu0 %v656
      %v658 = vpop.xlane.xlu0 %657
      %v659 = vadd.f32 %v653, %v658
      %660 = vst.msk [vmem:[%s461] sm:$0xff] %vm637, %v659
      %p661 = scmp.lt.s32.totalorder %s25, 1
      %s662 = scalar_select %p661, %s25, 1
      %s663 = smul.addr %s662, 8
      %s664 = scalar_lea.vmem %s6, %s663
      %p665 = scmp.lt.s32.totalorder %s25, 1
      %s666 = scalar_select %p665, %s25, 1
      %s667 = smul.addr %s666, 8
      %s668 = scalar_lea.vmem %s7, %s667
      %p669 = scmp.lt.s32.totalorder %s25, 1
      %s670 = scalar_select %p669, %s25, 1
      %s671 = smul.addr %s670, 8
      %s672 = scalar_lea.vmem %s8, %s671
      %p673 = scmp.lt.s32.totalorder %s25, 1
      %s674 = scalar_select %p673, %s25, 1
      %s675 = smul.addr %s674, 8
      %s676 = scalar_lea.vmem %s9, %s675
      // Predicated region
      $region49: #{model_forward.2} parent=43 // pred_check
        %p677 = pneg %p198
      $region50: #{model_forward.2} parent=43 // pred_check_branch
        %679 = sbr.rel (%p677) target = $region52
      $region51: #{model_forward.2} parent=43 // pred_region
        _
      $region52: #{model_forward.2} parent=43 // pred_fallthru
        _
      // Predicated region
      $region53: #{model_forward.2} parent=43 // pred_check
        %p680 = pneg %p224
      $region54: #{model_forward.2} parent=43 // pred_check_branch
        %682 = sbr.rel (%p680) target = $region56
      $region55: #{model_forward.2} parent=43 // pred_region
        _
      $region56: #{model_forward.2} parent=43 // pred_fallthru
        _
      // Predicated region
      $region57: #{model_forward.2} parent=43 // pred_check
        %p683 = pneg %p250
      $region58: #{model_forward.2} parent=43 // pred_check_branch
        %685 = sbr.rel (%p683) target = $region60
      $region59: #{model_forward.2} parent=43 // pred_region
        _
      $region60: #{model_forward.2} parent=43 // pred_fallthru
        _
      // Predicated region
      $region61: #{model_forward.2} parent=43 // pred_check
        %p686 = pneg %p276
      $region62: #{model_forward.2} parent=43 // pred_check_branch
        %688 = sbr.rel (%p686) target = $region64
      $region63: #{model_forward.2} parent=43 // pred_region
        _
      $region64: #{model_forward.2} parent=43 // pred_fallthru
        _
    $region44: #{model_forward.2} parent=5 // pred_fallthru
      _
    %p689 = scmp.le.s32.totalorder 2, %s16
    // Predicated region
    $region65: #{model_forward.2} parent=5 // pred_check
      %p690 = pneg %p689
    $region66: #{model_forward.2} parent=5 // pred_check_branch
      %692 = sbr.rel (%p690) target = $region68
    $region67: #{model_forward.2} parent=5 // pred_region
      %s693 = ssub.s32 %s16, 2
      // Predicated region
      $region69: #{model_forward.2} parent=67 // pred_check
        %p694 = pneg %p204
      $region70: #{model_forward.2} parent=67 // pred_check_branch
        %696 = sbr.rel (%p694) target = $region72
      $region71: #{model_forward.2} parent=67 // pred_region
        %p697 = scmp.lt.s32.totalorder %s27, 1
        %s698 = scalar_select %p697, %s27, 1
        %s699 = smul.addr %s698, 8
        %s700 = scalar_lea.vmem %s6, %s699
      $region72: #{model_forward.2} parent=67 // pred_fallthru
        _
      // Predicated region
      $region73: #{model_forward.2} parent=67 // pred_check
        %p701 = pneg %p230
      $region74: #{model_forward.2} parent=67 // pred_check_branch
        %703 = sbr.rel (%p701) target = $region76
      $region75: #{model_forward.2} parent=67 // pred_region
        %p704 = scmp.lt.s32.totalorder %s27, 1
        %s705 = scalar_select %p704, %s27, 1
        %s706 = smul.addr %s705, 8
        %s707 = scalar_lea.vmem %s7, %s706
      $region76: #{model_forward.2} parent=67 // pred_fallthru
        _
      // Predicated region
      $region77: #{model_forward.2} parent=67 // pred_check
        %p708 = pneg %p256
      $region78: #{model_forward.2} parent=67 // pred_check_branch
        %710 = sbr.rel (%p708) target = $region80
      $region79: #{model_forward.2} parent=67 // pred_region
        %p711 = scmp.lt.s32.totalorder %s27, 1
        %s712 = scalar_select %p711, %s27, 1
        %s713 = smul.addr %s712, 8
        %s714 = scalar_lea.vmem %s8, %s713
      $region80: #{model_forward.2} parent=67 // pred_fallthru
        _
      // Predicated region
      $region81: #{model_forward.2} parent=67 // pred_check
        %p715 = pneg %p282
      $region82: #{model_forward.2} parent=67 // pred_check_branch
        %717 = sbr.rel (%p715) target = $region84
      $region83: #{model_forward.2} parent=67 // pred_region
        %p718 = scmp.lt.s32.totalorder %s27, 1
        %s719 = scalar_select %p718, %s27, 1
        %s720 = smul.addr %s719, 8
        %s721 = scalar_lea.vmem %s9, %s720
      $region84: #{model_forward.2} parent=67 // pred_fallthru
        _
    $region68: #{model_forward.2} parent=5 // pred_fallthru
      _
  $region6: #{model_forward.2} parent=0 // loop_footer
    %s20 = sadd.s32 1, %s16
  $region7: #{model_forward.2} parent=0 // loop_footer_branch
    %15 = sbr.rel target = $region3
  $region8: #{model_forward.2} parent=0 // loop_exit
    _

</llo_original>
